<compile_context>
chip_gen: v5e
topology: v5e:2x2
jax: 0.10.0
libtpu: 0.0.40
codegen_flags: <defaults>
</compile_context>

<pallas_src>
import functools

import jax
import jax.numpy as jnp
from jax.experimental import pallas as pl
from jax.experimental.pallas import tpu as pltpu


def _scam_kernel(x_l_ref, x_r_ref,
                 gn_l_ref, bn_l_ref, gn_r_ref, bn_r_ref,
                 wbig_ref, bbig_ref,
                 beta_ref, gamma_ref,
                 out_l_ref, out_r_ref, attn_ref, attn_t_ref,
                 *, eps):
    T, W, C = x_l_ref.shape          # T rows of width W, C channels
    M = T * W

    xl3 = x_l_ref[...].astype(jnp.float32)
    xr3 = x_r_ref[...].astype(jnp.float32)
    xl = xl3.reshape(M, C)
    xr = xr3.reshape(M, C)

    def layernorm_c(x, g, b):
        # LayerNorm2d: mean / biased var over the channel axis (last axis here).
        mu = jnp.mean(x, axis=-1, keepdims=True)
        var = jnp.mean((x - mu) ** 2, axis=-1, keepdims=True)
        return (x - mu) * jax.lax.rsqrt(var + eps) * g + b      # g, b: (1, C)

    yl = layernorm_c(xl, gn_l_ref[...], bn_l_ref[...])
    yr = layernorm_c(xr, gn_r_ref[...], bn_r_ref[...])

    # ---- Fused projections: one (M, 4C) @ (4C, 4C) MXU matmul. ----
    # wbig = block_diag(wl1*scale, wl2, wr1, wr2); bbig matches column order.
    z = jnp.concatenate([yl, xl, yr, xr], axis=-1)               # (M, 4C)
    zp = jnp.dot(z, wbig_ref[...],
                 preferred_element_type=jnp.float32) + bbig_ref[...]
    q_l3 = zp[:, 0 * C:1 * C].reshape(T, W, C)
    v_l3 = zp[:, 1 * C:2 * C].reshape(T, W, C)
    q_r3 = zp[:, 2 * C:3 * C].reshape(T, W, C)
    v_r3 = zp[:, 3 * C:4 * C].reshape(T, W, C)

    def softmax_last(a):
        m = jnp.max(a, axis=-1, keepdims=True)
        e = jnp.exp(a - m)
        return e * pl.reciprocal(jnp.sum(e, axis=-1, keepdims=True), approx=True)

    # ---- r -> l direction first (keeps a single (T,W,W) path live). ----
    attn = jnp.einsum('twc,tkc->twk', q_l3, q_r3,
                      preferred_element_type=jnp.float32)        # (T, Wl, Wr)
    attn_ref[...] = attn.astype(attn_ref.dtype)
    f_r2l = jnp.einsum('twk,tkc->twc', softmax_last(attn), v_r3,
                       preferred_element_type=jnp.float32)
    out_l_ref[...] = (xl3 + f_r2l * beta_ref[...]).astype(out_l_ref.dtype)

    # ---- l -> r direction: attn^T via the (otherwise idle) XLU transpose
    # instead of a second MXU score einsum; written out from the kernel. ----
    attn_t = jnp.swapaxes(attn, -1, -2)                          # (T, Wr, Wl)
    attn_t_ref[...] = attn_t.astype(attn_t_ref.dtype)
    f_l2r = jnp.einsum('tkw,twc->tkc', softmax_last(attn_t), v_l3,
                       preferred_element_type=jnp.float32)
    out_r_ref[...] = (xr3 + f_l2r * gamma_ref[...]).astype(out_r_ref.dtype)


def _vmem_capacity_bytes():
    try:
        return int(pltpu.get_tpu_info().vmem_capacity_bytes)
    except Exception:
        return 64 << 20          # conservative (v7x-sized) fallback


def _pick_rows_per_block(n_rows, w, *, max_m, max_attn_bytes, min_steps=8):
    """Rows per grid step: big enough to fill the MXU / amortize the per-step
    pipeline overhead, bounded by the VMEM caps, and leaving >= min_steps grid
    steps so both v7x TensorCores get pipelined (double-buffered) work."""
    t_cap = max(1, min(max_m // max(w, 1), max_attn_bytes // max(4 * w * w, 1)))
    t_steps = max(1, -(-n_rows // min_steps))        # ceil(n_rows / min_steps)
    return max(1, min(t_cap, t_steps, n_rows))


def _block_diag4(a, b, c, d):
    n = a.shape[0]
    out = jnp.zeros((4 * n, 4 * n), a.dtype)
    for i, blk in enumerate((a, b, c, d)):
        out = out.at[i * n:(i + 1) * n, i * n:(i + 1) * n].set(blk)
    return out


def scam_forward(x_l, x_r, params, eps=1e-6):
    """x_l, x_r: NCHW (B, C, H, W) like the PyTorch module. Returns NCHW outs."""
    B, C, H, W = x_l.shape
    scale = float(C) ** (-0.5)
    R = B * H

    # NCHW -> (B*H, W, C) row slabs (kept in the wrapper; see TODO above).
    xl_rows = jnp.transpose(x_l, (0, 2, 3, 1)).reshape(R, W, C)
    xr_rows = jnp.transpose(x_r, (0, 2, 3, 1)).reshape(R, W, C)

    # Generation-aware block caps + explicit VMEM budget.
    vmem_cap = _vmem_capacity_bytes()
    if vmem_cap >= (100 << 20):          # v5e / v6e: 128 MiB physical VMEM
        max_m, max_attn_bytes = 2048, 4 << 20
    else:                                # v7x: 64 MiB per TensorCore
        max_m, max_attn_bytes = 1024, 2 << 20

    T = _pick_rows_per_block(R, W, max_m=max_m, max_attn_bytes=max_attn_bytes)
    n_steps = -(-R // T)                 # pad rows instead of shrinking T
    R_pad = n_steps * T
    if R_pad != R:
        pad = ((0, R_pad - R), (0, 0), (0, 0))
        xl_rows = jnp.pad(xl_rows, pad)
        xr_rows = jnp.pad(xr_rows, pad)

    slab_bytes = T * W * C * 4
    attn_bytes = T * W * W * 4
    est = (2 * 2 * 2 * slab_bytes            # double-buffered in/out slabs
           + 2 * 2 * attn_bytes              # double-buffered attn / attn_t
           + 14 * slab_bytes + 6 * attn_bytes
           + 8 * (4 * C) * (4 * C) * 4)      # live f32 intermediates + weights
    vmem_limit = int(min(0.9 * vmem_cap, max(32 << 20, 2 * est)))

    def vec(p):                      # (K,) -> (1, K)
        return p.reshape(1, -1)

    def convw(w):                    # PyTorch (Cout, Cin, 1, 1) -> (Cin, Cout)
        return jnp.transpose(w.reshape(C, C), (1, 0))

    # Fused projection weights; 1/sqrt(C) folded into the q_l block + bias.
    wbig = _block_diag4(convw(params["l_proj1_w"]) * scale,
                        convw(params["l_proj2_w"]),
                        convw(params["r_proj1_w"]),
                        convw(params["r_proj2_w"]))
    bbig = jnp.concatenate([params["l_proj1_b"] * scale, params["l_proj2_b"],
                            params["r_proj1_b"], params["r_proj2_b"]]
                           ).reshape(1, 4 * C)

    inputs = [
        xl_rows, xr_rows,
        vec(params["norm_l_w"]), vec(params["norm_l_b"]),
        vec(params["norm_r_w"]), vec(params["norm_r_b"]),
        wbig, bbig,
        vec(params["beta"]), vec(params["gamma"]),
    ]

    grid = (n_steps,)
    slab_spec = pl.BlockSpec((T, W, C), lambda t: (t, 0, 0))
    attn_spec = pl.BlockSpec((T, W, W), lambda t: (t, 0, 0))
    vecC_spec = pl.BlockSpec((1, C), lambda t: (0, 0))
    vec4C_spec = pl.BlockSpec((1, 4 * C), lambda t: (0, 0))
    mat_spec = pl.BlockSpec((4 * C, 4 * C), lambda t: (0, 0))

    in_specs = [slab_spec, slab_spec,
                vecC_spec, vecC_spec, vecC_spec, vecC_spec,
                mat_spec, vec4C_spec,
                vecC_spec, vecC_spec]

    out_shape = (
        jax.ShapeDtypeStruct((R_pad, W, C), x_l.dtype),
        jax.ShapeDtypeStruct((R_pad, W, C), x_r.dtype),
        jax.ShapeDtypeStruct((R_pad, W, W), jnp.float32),
        jax.ShapeDtypeStruct((R_pad, W, W), jnp.float32),
    )
    out_specs = [slab_spec, slab_spec, attn_spec, attn_spec]

    kernel = functools.partial(_scam_kernel, eps=eps)
    out_l_rows, out_r_rows, attn_rows, attn_t_rows = pl.pallas_call(
        kernel,
        out_shape=out_shape,
        grid_spec=pltpu.PrefetchScalarGridSpec(
            num_scalar_prefetch=0,
            grid=grid,
            in_specs=in_specs,
            out_specs=out_specs,
        ),
        compiler_params=pltpu.CompilerParams(
            dimension_semantics=("parallel",),
            vmem_limit_bytes=vmem_limit),
    )(*inputs)

    # back to PyTorch NCHW convention for the spatial outputs
    out_l_nchw = jnp.transpose(out_l_rows[:R].reshape(B, H, W, C), (0, 3, 1, 2))
    out_r_nchw = jnp.transpose(out_r_rows[:R].reshape(B, H, W, C), (0, 3, 1, 2))
    attn = attn_rows[:R].reshape(B, H, W, W)
    attn_t = attn_t_rows[:R].reshape(B, H, W, W)
    return out_l_nchw, out_r_nchw, (attn, attn_t)


def scam_reference(x_l, x_r, params, eps=1e-6):
    """Plain-JAX reference mirroring the PyTorch forward exactly (NCHW)."""
    B, C, H, W = x_l.shape
    scale = float(C) ** (-0.5)
    hi = jax.lax.Precision.HIGHEST

    def ln(x, w, b):
        mu = x.mean(1, keepdims=True)
        var = ((x - mu) ** 2).mean(1, keepdims=True)
        y = (x - mu) / jnp.sqrt(var + eps)
        return w.reshape(1, C, 1, 1) * y + b.reshape(1, C, 1, 1)

    def conv1x1(x, w, b):
        return (jnp.einsum("nchw,oc->nohw", x, w.reshape(C, C), precision=hi)
                + b.reshape(1, C, 1, 1))

    feat_l = conv1x1(ln(x_l, params["norm_l_w"], params["norm_l_b"]),
                     params["l_proj1_w"], params["l_proj1_b"])
    feat_r = conv1x1(ln(x_r, params["norm_r_w"], params["norm_r_b"]),
                     params["r_proj1_w"], params["r_proj1_b"])
    Q_l = jnp.transpose(feat_l, (0, 2, 3, 1))
    Q_r_T = jnp.transpose(feat_r, (0, 2, 1, 3))
    V_l = jnp.transpose(conv1x1(x_l, params["l_proj2_w"], params["l_proj2_b"]), (0, 2, 3, 1))
    V_r = jnp.transpose(conv1x1(x_r, params["r_proj2_w"], params["r_proj2_b"]), (0, 2, 3, 1))

    attention = jnp.matmul(Q_l, Q_r_T, precision=hi) * scale
    F_r2l = jnp.matmul(jax.nn.softmax(attention, axis=-1), V_r, precision=hi)
    F_l2r = jnp.matmul(jax.nn.softmax(jnp.transpose(attention, (0, 1, 3, 2)), axis=-1),
                       V_l, precision=hi)
    F_r2l = jnp.transpose(F_r2l, (0, 3, 1, 2)) * params["beta"].reshape(1, C, 1, 1)
    F_l2r = jnp.transpose(F_l2r, (0, 3, 1, 2)) * params["gamma"].reshape(1, C, 1, 1)
    return (x_l + F_r2l, x_r + F_l2r,
            (attention, jnp.transpose(attention, (0, 1, 3, 2))))


def init_params(key, c):
    """Deterministic synthetic parameters (shapes from SCAM.__init__)."""
    ks = jax.random.split(key, 12)
    p = {
        # LayerNorm2d defaults: weight=ones, bias=zeros
        "norm_l_w": jnp.ones((c,), jnp.float32),
        "norm_l_b": jnp.zeros((c,), jnp.float32),
        "norm_r_w": jnp.ones((c,), jnp.float32),
        "norm_r_b": jnp.zeros((c,), jnp.float32),
        # 1x1 conv weights (Cout, Cin, 1, 1) and biases (C,)
        "l_proj1_w": 0.2 * jax.random.normal(ks[0], (c, c, 1, 1), jnp.float32),
        "l_proj1_b": 0.1 * jax.random.normal(ks[1], (c,), jnp.float32),
        "r_proj1_w": 0.2 * jax.random.normal(ks[2], (c, c, 1, 1), jnp.float32),
        "r_proj1_b": 0.1 * jax.random.normal(ks[3], (c,), jnp.float32),
        "l_proj2_w": 0.2 * jax.random.normal(ks[4], (c, c, 1, 1), jnp.float32),
        "l_proj2_b": 0.1 * jax.random.normal(ks[5], (c,), jnp.float32),
        "r_proj2_w": 0.2 * jax.random.normal(ks[6], (c, c, 1, 1), jnp.float32),
        "r_proj2_b": 0.1 * jax.random.normal(ks[7], (c,), jnp.float32),
        # beta/gamma are zero-init in the module; use small nonzero values here
        # so the residual path is actually exercised (still deterministic).
        "beta": 0.05 * jax.random.normal(ks[8], (c,), jnp.float32),
        "gamma": 0.05 * jax.random.normal(ks[9], (c,), jnp.float32),
    }
    return p


if __name__ == "__main__":
    B, C, H, W = 2, 4, 16, 16
    key = jax.random.PRNGKey(0)
    k_xl, k_xr, k_p = jax.random.split(key, 3)
    x_l = jax.random.normal(k_xl, (B, C, H, W), jnp.float32)
    x_r = jax.random.normal(k_xr, (B, C, H, W), jnp.float32)
    params = init_params(k_p, C)

    out_l, out_r, (attn, attn_t) = jax.block_until_ready(
        scam_forward(x_l, x_r, params))

    ref_l, ref_r, (ref_attn, ref_attn_t) = scam_reference(x_l, x_r, params)

    assert out_l.shape == (B, C, H, W) and out_r.shape == (B, C, H, W)
    assert attn.shape == (B, H, W, W) and attn_t.shape == (B, H, W, W)
    for got, want in [(out_l, ref_l), (out_r, ref_r),
                      (attn, ref_attn), (attn_t, ref_attn_t)]:
        assert jnp.max(jnp.abs(got - want)) < 1e-3, float(jnp.max(jnp.abs(got - want)))

    print("KERNEL_OK")
</pallas_src>

<mosaic_0001>
module attributes {stable_mosaic.version = 11 : i64} {
  func.func @_scam_kernel(%arg0: i32, %arg1: memref<4x16x4xf32, #tpu.memory_space<vmem>>, %arg2: memref<4x16x4xf32, #tpu.memory_space<vmem>>, %arg3: memref<1x4xf32, #tpu.memory_space<vmem>>, %arg4: memref<1x4xf32, #tpu.memory_space<vmem>>, %arg5: memref<1x4xf32, #tpu.memory_space<vmem>>, %arg6: memref<1x4xf32, #tpu.memory_space<vmem>>, %arg7: memref<16x16xf32, #tpu.memory_space<vmem>>, %arg8: memref<1x16xf32, #tpu.memory_space<vmem>>, %arg9: memref<1x4xf32, #tpu.memory_space<vmem>>, %arg10: memref<1x4xf32, #tpu.memory_space<vmem>>, %arg11: memref<4x16x4xf32, #tpu.memory_space<vmem>>, %arg12: memref<4x16x4xf32, #tpu.memory_space<vmem>>, %arg13: memref<4x16x16xf32, #tpu.memory_space<vmem>>, %arg14: memref<4x16x16xf32, #tpu.memory_space<vmem>>) attributes {dimension_semantics = [#tpu.dimension_semantics<parallel>], iteration_bounds = array<i64: 8>, scalar_prefetch = 0 : i64, scratch_operands = 0 : i64, tpu.core_type = #tpu.core_type<tc>, window_params = [{transform_indices = @transform_0, window_bounds = array<i64: 4, 16, 4>}, {transform_indices = @transform_1, window_bounds = array<i64: 4, 16, 4>}, {pipeline_mode = #tpu.pipeline_mode<synchronous>, transform_indices = @transform_2, window_bounds = array<i64: 1, 4>}, {pipeline_mode = #tpu.pipeline_mode<synchronous>, transform_indices = @transform_3, window_bounds = array<i64: 1, 4>}, {pipeline_mode = #tpu.pipeline_mode<synchronous>, transform_indices = @transform_4, window_bounds = array<i64: 1, 4>}, {pipeline_mode = #tpu.pipeline_mode<synchronous>, transform_indices = @transform_5, window_bounds = array<i64: 1, 4>}, {pipeline_mode = #tpu.pipeline_mode<synchronous>, transform_indices = @transform_6, window_bounds = array<i64: 16, 16>}, {pipeline_mode = #tpu.pipeline_mode<synchronous>, transform_indices = @transform_7, window_bounds = array<i64: 1, 16>}, {pipeline_mode = #tpu.pipeline_mode<synchronous>, transform_indices = @transform_8, window_bounds = array<i64: 1, 4>}, {pipeline_mode = #tpu.pipeline_mode<synchronous>, transform_indices = @transform_9, window_bounds = array<i64: 1, 4>}, {transform_indices = @transform_10, window_bounds = array<i64: 4, 16, 4>}, {transform_indices = @transform_11, window_bounds = array<i64: 4, 16, 4>}, {transform_indices = @transform_12, window_bounds = array<i64: 4, 16, 16>}, {transform_indices = @transform_13, window_bounds = array<i64: 4, 16, 16>}]} {
    %c0 = arith.constant 0 : index
    %c0_0 = arith.constant 0 : index
    %c0_1 = arith.constant 0 : index
    %0 = vector.load %arg1[%c0, %c0_0, %c0_1] : memref<4x16x4xf32, #tpu.memory_space<vmem>>, vector<4x16x4xf32>
    %c0_2 = arith.constant 0 : index
    %c0_3 = arith.constant 0 : index
    %c0_4 = arith.constant 0 : index
    %1 = vector.load %arg2[%c0_2, %c0_3, %c0_4] : memref<4x16x4xf32, #tpu.memory_space<vmem>>, vector<4x16x4xf32>
    %2 = vector.shape_cast %0 : vector<4x16x4xf32> to vector<64x4xf32>
    %3 = vector.shape_cast %1 : vector<4x16x4xf32> to vector<64x4xf32>
    %c0_5 = arith.constant 0 : index
    %c0_6 = arith.constant 0 : index
    %4 = vector.load %arg3[%c0_5, %c0_6] : memref<1x4xf32, #tpu.memory_space<vmem>>, vector<1x4xf32>
    %c0_7 = arith.constant 0 : index
    %c0_8 = arith.constant 0 : index
    %5 = vector.load %arg4[%c0_7, %c0_8] : memref<1x4xf32, #tpu.memory_space<vmem>>, vector<1x4xf32>
    %cst = arith.constant dense<0.000000e+00> : vector<64xf32>
    %6 = vector.multi_reduction <add>, %2, %cst [1] : vector<64x4xf32> to vector<64xf32>
    %7 = vector.shape_cast %6 : vector<64xf32> to vector<64x1xf32>
    %cst_9 = arith.constant 4.000000e+00 : f32
    %8 = vector.broadcast %cst_9 : f32 to vector<64x1xf32>
    %9 = arith.divf %7, %8 : vector<64x1xf32>
    %10 = vector.broadcast %9 : vector<64x1xf32> to vector<64x4xf32>
    %11 = arith.subf %2, %10 : vector<64x4xf32>
    %12 = arith.mulf %11, %11 : vector<64x4xf32>
    %cst_10 = arith.constant dense<0.000000e+00> : vector<64xf32>
    %13 = vector.multi_reduction <add>, %12, %cst_10 [1] : vector<64x4xf32> to vector<64xf32>
    %14 = vector.shape_cast %13 : vector<64xf32> to vector<64x1xf32>
    %cst_11 = arith.constant 4.000000e+00 : f32
    %15 = vector.broadcast %cst_11 : f32 to vector<64x1xf32>
    %16 = arith.divf %14, %15 : vector<64x1xf32>
    %17 = vector.broadcast %9 : vector<64x1xf32> to vector<64x4xf32>
    %18 = arith.subf %2, %17 : vector<64x4xf32>
    %cst_12 = arith.constant 9.99999997E-7 : f32
    %19 = vector.broadcast %cst_12 : f32 to vector<64x1xf32>
    %20 = arith.addf %16, %19 : vector<64x1xf32>
    %21 = math.rsqrt %20 : vector<64x1xf32>
    %22 = vector.broadcast %21 : vector<64x1xf32> to vector<64x4xf32>
    %23 = arith.mulf %18, %22 : vector<64x4xf32>
    %24 = vector.broadcast %4 : vector<1x4xf32> to vector<64x4xf32>
    %25 = arith.mulf %23, %24 : vector<64x4xf32>
    %26 = vector.broadcast %5 : vector<1x4xf32> to vector<64x4xf32>
    %27 = arith.addf %25, %26 : vector<64x4xf32>
    %c0_13 = arith.constant 0 : index
    %c0_14 = arith.constant 0 : index
    %28 = vector.load %arg5[%c0_13, %c0_14] : memref<1x4xf32, #tpu.memory_space<vmem>>, vector<1x4xf32>
    %c0_15 = arith.constant 0 : index
    %c0_16 = arith.constant 0 : index
    %29 = vector.load %arg6[%c0_15, %c0_16] : memref<1x4xf32, #tpu.memory_space<vmem>>, vector<1x4xf32>
    %cst_17 = arith.constant dense<0.000000e+00> : vector<64xf32>
    %30 = vector.multi_reduction <add>, %3, %cst_17 [1] : vector<64x4xf32> to vector<64xf32>
    %31 = vector.shape_cast %30 : vector<64xf32> to vector<64x1xf32>
    %cst_18 = arith.constant 4.000000e+00 : f32
    %32 = vector.broadcast %cst_18 : f32 to vector<64x1xf32>
    %33 = arith.divf %31, %32 : vector<64x1xf32>
    %34 = vector.broadcast %33 : vector<64x1xf32> to vector<64x4xf32>
    %35 = arith.subf %3, %34 : vector<64x4xf32>
    %36 = arith.mulf %35, %35 : vector<64x4xf32>
    %cst_19 = arith.constant dense<0.000000e+00> : vector<64xf32>
    %37 = vector.multi_reduction <add>, %36, %cst_19 [1] : vector<64x4xf32> to vector<64xf32>
    %38 = vector.shape_cast %37 : vector<64xf32> to vector<64x1xf32>
    %cst_20 = arith.constant 4.000000e+00 : f32
    %39 = vector.broadcast %cst_20 : f32 to vector<64x1xf32>
    %40 = arith.divf %38, %39 : vector<64x1xf32>
    %41 = vector.broadcast %33 : vector<64x1xf32> to vector<64x4xf32>
    %42 = arith.subf %3, %41 : vector<64x4xf32>
    %cst_21 = arith.constant 9.99999997E-7 : f32
    %43 = vector.broadcast %cst_21 : f32 to vector<64x1xf32>
    %44 = arith.addf %40, %43 : vector<64x1xf32>
    %45 = math.rsqrt %44 : vector<64x1xf32>
    %46 = vector.broadcast %45 : vector<64x1xf32> to vector<64x4xf32>
    %47 = arith.mulf %42, %46 : vector<64x4xf32>
    %48 = vector.broadcast %28 : vector<1x4xf32> to vector<64x4xf32>
    %49 = arith.mulf %47, %48 : vector<64x4xf32>
    %50 = vector.broadcast %29 : vector<1x4xf32> to vector<64x4xf32>
    %51 = arith.addf %49, %50 : vector<64x4xf32>
    %52 = tpu.concatenate %27, %2, %51, %3 in 1 : vector<64x4xf32>, vector<64x4xf32>, vector<64x4xf32>, vector<64x4xf32> -> vector<64x16xf32>
    %c0_22 = arith.constant 0 : index
    %c0_23 = arith.constant 0 : index
    %53 = vector.load %arg7[%c0_22, %c0_23] : memref<16x16xf32, #tpu.memory_space<vmem>>, vector<16x16xf32>
    %cst_24 = arith.constant dense<0.000000e+00> : vector<64x16xf32>
    %54 = tpu.matmul %52, %53, %cst_24 {dimension_numbers = #tpu.dot_dimension_numbers<[1], [0], [0], [1], [0, 0, 1, 1], [], []>} : vector<64x16xf32>, vector<16x16xf32>, vector<64x16xf32> -> vector<64x16xf32>
    %c0_25 = arith.constant 0 : index
    %c0_26 = arith.constant 0 : index
    %55 = vector.load %arg8[%c0_25, %c0_26] : memref<1x16xf32, #tpu.memory_space<vmem>>, vector<1x16xf32>
    %56 = vector.broadcast %55 : vector<1x16xf32> to vector<64x16xf32>
    %57 = arith.addf %54, %56 : vector<64x16xf32>
    %58 = vector.extract_strided_slice %57 {offsets = [0, 0], sizes = [64, 4], strides = [1, 1]} : vector<64x16xf32> to vector<64x4xf32>
    %59 = vector.shape_cast %58 : vector<64x4xf32> to vector<4x16x4xf32>
    %60 = vector.extract_strided_slice %57 {offsets = [0, 4], sizes = [64, 4], strides = [1, 1]} : vector<64x16xf32> to vector<64x4xf32>
    %61 = vector.shape_cast %60 : vector<64x4xf32> to vector<4x16x4xf32>
    %62 = vector.extract_strided_slice %57 {offsets = [0, 8], sizes = [64, 4], strides = [1, 1]} : vector<64x16xf32> to vector<64x4xf32>
    %63 = vector.shape_cast %62 : vector<64x4xf32> to vector<4x16x4xf32>
    %64 = vector.extract_strided_slice %57 {offsets = [0, 12], sizes = [64, 4], strides = [1, 1]} : vector<64x16xf32> to vector<64x4xf32>
    %65 = vector.shape_cast %64 : vector<64x4xf32> to vector<4x16x4xf32>
    "tpu.trace_start"() <{level = 10 : i32, message = "twc,tkc->twk"}> : () -> ()
    %cst_27 = arith.constant dense<0.000000e+00> : vector<4x16x16xf32>
    %66 = tpu.matmul %59, %63, %cst_27 {dimension_numbers = #tpu.dot_dimension_numbers<[2], [2], [1], [1], [0, 0, 0, 1, 1, 1], [0], [0]>} : vector<4x16x4xf32>, vector<4x16x4xf32>, vector<4x16x16xf32> -> vector<4x16x16xf32>
    "tpu.trace_stop"() : () -> ()
    %c0_28 = arith.constant 0 : index
    %c0_29 = arith.constant 0 : index
    %c0_30 = arith.constant 0 : index
    %67 = vector.load %arg13[%c0_28, %c0_29, %c0_30] : memref<4x16x16xf32, #tpu.memory_space<vmem>>, vector<4x16x16xf32>
    tpu.vector_store %arg13[%c0_28, %c0_29, %c0_30], %66 {strides = array<i32>} : memref<4x16x16xf32, #tpu.memory_space<vmem>>, vector<4x16x16xf32>,
    %cst_31 = arith.constant dense<0xFF800000> : vector<4x16xf32>
    %68 = vector.multi_reduction <maximumf>, %66, %cst_31 [2] : vector<4x16x16xf32> to vector<4x16xf32>
    %69 = vector.shape_cast %68 : vector<4x16xf32> to vector<4x16x1xf32>
    %70 = vector.broadcast %69 : vector<4x16x1xf32> to vector<4x16x16xf32>
    %71 = arith.subf %66, %70 : vector<4x16x16xf32>
    %72 = math.exp %71 : vector<4x16x16xf32>
    %cst_32 = arith.constant dense<0.000000e+00> : vector<4x16xf32>
    %73 = vector.multi_reduction <add>, %72, %cst_32 [2] : vector<4x16x16xf32> to vector<4x16xf32>
    %74 = vector.shape_cast %73 : vector<4x16xf32> to vector<4x16x1xf32>
    %75 = tpu.reciprocal %74 {approx = true} : vector<4x16x1xf32> -> vector<4x16x1xf32>
    %76 = vector.broadcast %75 : vector<4x16x1xf32> to vector<4x16x16xf32>
    %77 = arith.mulf %72, %76 : vector<4x16x16xf32>
    "tpu.trace_start"() <{level = 10 : i32, message = "twk,tkc->twc"}> : () -> ()
    %cst_33 = arith.constant dense<0.000000e+00> : vector<4x16x4xf32>
    %78 = tpu.matmul %77, %65, %cst_33 {dimension_numbers = #tpu.dot_dimension_numbers<[2], [1], [1], [2], [0, 0, 0, 1, 1, 2], [0], [0]>} : vector<4x16x16xf32>, vector<4x16x4xf32>, vector<4x16x4xf32> -> vector<4x16x4xf32>
    "tpu.trace_stop"() : () -> ()
    %c0_34 = arith.constant 0 : index
    %c0_35 = arith.constant 0 : index
    %79 = vector.load %arg9[%c0_34, %c0_35] : memref<1x4xf32, #tpu.memory_space<vmem>>, vector<1x4xf32>
    %80 = vector.shape_cast %79 : vector<1x4xf32> to vector<1x1x4xf32>
    %81 = vector.broadcast %80 : vector<1x1x4xf32> to vector<4x16x4xf32>
    %82 = arith.mulf %78, %81 : vector<4x16x4xf32>
    %83 = arith.addf %0, %82 : vector<4x16x4xf32>
    %c0_36 = arith.constant 0 : index
    %c0_37 = arith.constant 0 : index
    %c0_38 = arith.constant 0 : index
    %84 = vector.load %arg11[%c0_36, %c0_37, %c0_38] : memref<4x16x4xf32, #tpu.memory_space<vmem>>, vector<4x16x4xf32>
    tpu.vector_store %arg11[%c0_36, %c0_37, %c0_38], %83 {strides = array<i32>} : memref<4x16x4xf32, #tpu.memory_space<vmem>>, vector<4x16x4xf32>,
    %85 = tpu.transpose %66, [0, 2, 1] : vector<4x16x16xf32> -> vector<4x16x16xf32>
    %c0_39 = arith.constant 0 : index
    %c0_40 = arith.constant 0 : index
    %c0_41 = arith.constant 0 : index
    %86 = vector.load %arg14[%c0_39, %c0_40, %c0_41] : memref<4x16x16xf32, #tpu.memory_space<vmem>>, vector<4x16x16xf32>
    tpu.vector_store %arg14[%c0_39, %c0_40, %c0_41], %85 {strides = array<i32>} : memref<4x16x16xf32, #tpu.memory_space<vmem>>, vector<4x16x16xf32>,
    %cst_42 = arith.constant dense<0xFF800000> : vector<4x16xf32>
    %87 = vector.multi_reduction <maximumf>, %85, %cst_42 [2] : vector<4x16x16xf32> to vector<4x16xf32>
    %88 = vector.shape_cast %87 : vector<4x16xf32> to vector<4x16x1xf32>
    %89 = vector.broadcast %88 : vector<4x16x1xf32> to vector<4x16x16xf32>
    %90 = arith.subf %85, %89 : vector<4x16x16xf32>
    %91 = math.exp %90 : vector<4x16x16xf32>
    %cst_43 = arith.constant dense<0.000000e+00> : vector<4x16xf32>
    %92 = vector.multi_reduction <add>, %91, %cst_43 [2] : vector<4x16x16xf32> to vector<4x16xf32>
    %93 = vector.shape_cast %92 : vector<4x16xf32> to vector<4x16x1xf32>
    %94 = tpu.reciprocal %93 {approx = true} : vector<4x16x1xf32> -> vector<4x16x1xf32>
    %95 = vector.broadcast %94 : vector<4x16x1xf32> to vector<4x16x16xf32>
    %96 = arith.mulf %91, %95 : vector<4x16x16xf32>
    "tpu.trace_start"() <{level = 10 : i32, message = "tkw,twc->tkc"}> : () -> ()
    %cst_44 = arith.constant dense<0.000000e+00> : vector<4x16x4xf32>
    %97 = tpu.matmul %96, %61, %cst_44 {dimension_numbers = #tpu.dot_dimension_numbers<[2], [1], [1], [2], [0, 0, 0, 1, 1, 2], [0], [0]>} : vector<4x16x16xf32>, vector<4x16x4xf32>, vector<4x16x4xf32> -> vector<4x16x4xf32>
    "tpu.trace_stop"() : () -> ()
    %c0_45 = arith.constant 0 : index
    %c0_46 = arith.constant 0 : index
    %98 = vector.load %arg10[%c0_45, %c0_46] : memref<1x4xf32, #tpu.memory_space<vmem>>, vector<1x4xf32>
    %99 = vector.shape_cast %98 : vector<1x4xf32> to vector<1x1x4xf32>
    %100 = vector.broadcast %99 : vector<1x1x4xf32> to vector<4x16x4xf32>
    %101 = arith.mulf %97, %100 : vector<4x16x4xf32>
    %102 = arith.addf %1, %101 : vector<4x16x4xf32>
    %c0_47 = arith.constant 0 : index
    %c0_48 = arith.constant 0 : index
    %c0_49 = arith.constant 0 : index
    %103 = vector.load %arg12[%c0_47, %c0_48, %c0_49] : memref<4x16x4xf32, #tpu.memory_space<vmem>>, vector<4x16x4xf32>
    tpu.vector_store %arg12[%c0_47, %c0_48, %c0_49], %102 {strides = array<i32>} : memref<4x16x4xf32, #tpu.memory_space<vmem>>, vector<4x16x4xf32>,
    return
  }
  func.func @transform_0(%arg0: i32) -> (i32, i32, i32) {
    %c0_i32 = arith.constant 0 : i32
    %c0_i32_0 = arith.constant 0 : i32
    %c0_i32_1 = arith.constant 0 : i32
    return %arg0, %c0_i32, %c0_i32_0 : i32, i32, i32
  }
  func.func @transform_1(%arg0: i32) -> (i32, i32, i32) {
    %c0_i32 = arith.constant 0 : i32
    %c0_i32_0 = arith.constant 0 : i32
    %c0_i32_1 = arith.constant 0 : i32
    return %arg0, %c0_i32, %c0_i32_0 : i32, i32, i32
  }
  func.func @transform_2(%arg0: i32) -> (i32, i32) {
    %c0_i32 = arith.constant 0 : i32
    %c0_i32_0 = arith.constant 0 : i32
    %c0_i32_1 = arith.constant 0 : i32
    return %c0_i32, %c0_i32_0 : i32, i32
  }
  func.func @transform_3(%arg0: i32) -> (i32, i32) {
    %c0_i32 = arith.constant 0 : i32
    %c0_i32_0 = arith.constant 0 : i32
    %c0_i32_1 = arith.constant 0 : i32
    return %c0_i32, %c0_i32_0 : i32, i32
  }
  func.func @transform_4(%arg0: i32) -> (i32, i32) {
    %c0_i32 = arith.constant 0 : i32
    %c0_i32_0 = arith.constant 0 : i32
    %c0_i32_1 = arith.constant 0 : i32
    return %c0_i32, %c0_i32_0 : i32, i32
  }
  func.func @transform_5(%arg0: i32) -> (i32, i32) {
    %c0_i32 = arith.constant 0 : i32
    %c0_i32_0 = arith.constant 0 : i32
    %c0_i32_1 = arith.constant 0 : i32
    return %c0_i32, %c0_i32_0 : i32, i32
  }
  func.func @transform_6(%arg0: i32) -> (i32, i32) {
    %c0_i32 = arith.constant 0 : i32
    %c0_i32_0 = arith.constant 0 : i32
    %c0_i32_1 = arith.constant 0 : i32
    return %c0_i32, %c0_i32_0 : i32, i32
  }
  func.func @transform_7(%arg0: i32) -> (i32, i32) {
    %c0_i32 = arith.constant 0 : i32
    %c0_i32_0 = arith.constant 0 : i32
    %c0_i32_1 = arith.constant 0 : i32
    return %c0_i32, %c0_i32_0 : i32, i32
  }
  func.func @transform_8(%arg0: i32) -> (i32, i32) {
    %c0_i32 = arith.constant 0 : i32
    %c0_i32_0 = arith.constant 0 : i32
    %c0_i32_1 = arith.constant 0 : i32
    return %c0_i32, %c0_i32_0 : i32, i32
  }
  func.func @transform_9(%arg0: i32) -> (i32, i32) {
    %c0_i32 = arith.constant 0 : i32
    %c0_i32_0 = arith.constant 0 : i32
    %c0_i32_1 = arith.constant 0 : i32
    return %c0_i32, %c0_i32_0 : i32, i32
  }
  func.func @transform_10(%arg0: i32) -> (i32, i32, i32) {
    %c0_i32 = arith.constant 0 : i32
    %c0_i32_0 = arith.constant 0 : i32
    %c0_i32_1 = arith.constant 0 : i32
    return %arg0, %c0_i32, %c0_i32_0 : i32, i32, i32
  }
  func.func @transform_11(%arg0: i32) -> (i32, i32, i32) {
    %c0_i32 = arith.constant 0 : i32
    %c0_i32_0 = arith.constant 0 : i32
    %c0_i32_1 = arith.constant 0 : i32
    return %arg0, %c0_i32, %c0_i32_0 : i32, i32, i32
  }
  func.func @transform_12(%arg0: i32) -> (i32, i32, i32) {
    %c0_i32 = arith.constant 0 : i32
    %c0_i32_0 = arith.constant 0 : i32
    %c0_i32_1 = arith.constant 0 : i32
    return %arg0, %c0_i32, %c0_i32_0 : i32, i32, i32
  }
  func.func @transform_13(%arg0: i32) -> (i32, i32, i32) {
    %c0_i32 = arith.constant 0 : i32
    %c0_i32_0 = arith.constant 0 : i32
    %c0_i32_1 = arith.constant 0 : i32
    return %arg0, %c0_i32, %c0_i32_0 : i32, i32, i32
  }
}

</mosaic_0001>

<llo_original>
// kernel: tpu_custom_call.1
$region0: #{tpu_custom_call.1}
  #allocation0 [shape = 'u32[]', space=smem, size = 0x4, offset = 0x4, fixed_abs, tag = 'smem constant byte address 0x4 - core index']
  #allocation1 [shape = 'u32[72,128]{1,0:T(1,128)}', space=vmem, size = 0x9000, scoped, tag = 'internal scratch']
  %s0 = inlined_call_operand.vmem [shape: f32[32,16,4], index: 0, kind: input, shape index: {}]
  %s1 = inlined_call_operand.vmem [shape: f32[32,16,4], index: 1, kind: input, shape index: {}]
  %s2 = inlined_call_operand.vmem [shape: f32[1,4], index: 2, kind: input, shape index: {}]
  %s3 = inlined_call_operand.vmem [shape: f32[1,4], index: 3, kind: input, shape index: {}]
  %s4 = inlined_call_operand.vmem [shape: f32[1,4], index: 4, kind: input, shape index: {}]
  %s5 = inlined_call_operand.vmem [shape: f32[1,4], index: 5, kind: input, shape index: {}]
  %s6 = inlined_call_operand.vmem [shape: f32[16,16], index: 6, kind: input, shape index: {}]
  %s7 = inlined_call_operand.vmem [shape: f32[1,16], index: 7, kind: input, shape index: {}]
  %s8 = inlined_call_operand.vmem [shape: f32[1,4], index: 8, kind: input, shape index: {}]
  %s9 = inlined_call_operand.vmem [shape: f32[1,4], index: 9, kind: input, shape index: {}]
  %s10 = inlined_call_operand.vmem [shape: f32[32,16,4], index: 10, kind: output, shape index: {0}]
  %s11 = inlined_call_operand.vmem [shape: f32[32,16,4], index: 11, kind: output, shape index: {1}]
  %s12 = inlined_call_operand.vmem [shape: f32[32,16,16], index: 12, kind: output, shape index: {2}]
  %s13 = inlined_call_operand.vmem [shape: f32[32,16,16], index: 13, kind: output, shape index: {3}]
  %14 = xla_tuple %s10, %s11, %s12, %s13
  %s15 = sld [smem:[#allocation0]]
  $region97: #{tpu_custom_call.1} parent=0
    _
  %s17 = ssub.s32 1, %s15
  %s18 = scalar_select 0, %s17, %s15
  loop: start=0, step=1, limit=10
  $region2: #{tpu_custom_call.1} parent=0 // loop_pre_header
    _
  $region3: #{tpu_custom_call.1} parent=0 // loop_header
    %s20 = sphi 0, %s24
    %p21 = scmp.ge.s32.totalorder %s20, 10
    %s30 = sphi 0, %s32
    %s33 = sphi 0, %s30
    %s34 = sphi 0, %s33
    %s50 = sphi 0, %s34
    %s56 = sphi 0, %s58
    %s59 = sphi 0, %s56
    %s60 = sphi 0, %s59
    %s76 = sphi 0, %s60
    %s80 = sphi 0, %s80
    %s82 = sphi 0, %s80
    %s83 = sphi 0, %s82
    %s97 = sphi 0, %s83
    %s101 = sphi 0, %s101
    %s103 = sphi 0, %s101
    %s104 = sphi 0, %s103
    %s118 = sphi 0, %s104
    %s122 = sphi 0, %s122
    %s124 = sphi 0, %s122
    %s125 = sphi 0, %s124
    %s139 = sphi 0, %s125
    %s143 = sphi 0, %s143
    %s145 = sphi 0, %s143
    %s146 = sphi 0, %s145
    %s160 = sphi 0, %s146
    %s164 = sphi 0, %s164
    %s166 = sphi 0, %s164
    %s167 = sphi 0, %s166
    %s181 = sphi 0, %s167
    %s185 = sphi 0, %s185
    %s187 = sphi 0, %s185
    %s188 = sphi 0, %s187
    %s202 = sphi 0, %s188
    %s206 = sphi 0, %s206
    %s208 = sphi 0, %s206
    %s209 = sphi 0, %s208
    %s223 = sphi 0, %s209
    %s227 = sphi 0, %s227
    %s229 = sphi 0, %s227
    %s230 = sphi 0, %s229
    %s244 = sphi 0, %s230
    %s250 = sphi 0, %s252
    %s253 = sphi 0, %s250
    %s254 = sphi 0, %s253
    %s270 = sphi 0, %s254
    %s276 = sphi 0, %s278
    %s279 = sphi 0, %s276
    %s280 = sphi 0, %s279
    %s296 = sphi 0, %s280
    %s302 = sphi 0, %s304
    %s305 = sphi 0, %s302
    %s306 = sphi 0, %s305
    %s322 = sphi 0, %s306
    %s328 = sphi 0, %s330
    %s331 = sphi 0, %s328
    %s332 = sphi 0, %s331
    %s348 = sphi 0, %s332
  $region4: #{tpu_custom_call.1} parent=0 // loop_header_branch
    %23 = sbr.rel (%p21) target = $region8
  $region5: #{tpu_custom_call.1} parent=0 // loop_body
    %s25 = ssub.s32 %s20, 1
    %s26 = ssub.s32 %s20, 2
    %s27 = sadd.s32 %s20, 1
    %s28 = ssub.s32 %s20, %s27
    %p29 = scmp.eq.s32.totalorder %s28, 0
    %s31 = sadd.s32 %s30, 1
    %s32 = scalar_select %p29, %s30, %s31
    %p35 = pneg %p29
    %p36 = scmp.eq.s32.totalorder %s20, 7
    %p37 = por %p35, %p36
    %p38 = scmp.ne.s32.totalorder %s30, %s33
    %p39 = scmp.eq.s32.totalorder %s20, 0
    %p40 = por %p38, %p39
    %p41 = scmp.ne.s32.totalorder %s30, %s33
    %p42 = scmp.eq.s32.totalorder %s25, 7
    %p43 = por %p41, %p42
    %p44 = scmp.ne.s32.totalorder %s33, %s34
    %p45 = scmp.eq.s32.totalorder %s25, 0
    %p46 = por %p44, %p45
    %p47 = scmp.ne.s32.totalorder %s33, %s34
    %p48 = scmp.eq.s32.totalorder %s26, 7
    %p49 = por %p47, %p48
    %p51 = scmp.ne.s32.totalorder %s34, %s50
    %p52 = scmp.eq.s32.totalorder %s26, 0
    %p53 = por %p51, %p52
    %s54 = ssub.s32 %s20, %s27
    %p55 = scmp.eq.s32.totalorder %s54, 0
    %s57 = sadd.s32 %s56, 1
    %s58 = scalar_select %p55, %s56, %s57
    %p61 = pneg %p55
    %p62 = scmp.eq.s32.totalorder %s20, 7
    %p63 = por %p61, %p62
    %p64 = scmp.ne.s32.totalorder %s56, %s59
    %p65 = scmp.eq.s32.totalorder %s20, 0
    %p66 = por %p64, %p65
    %p67 = scmp.ne.s32.totalorder %s56, %s59
    %p68 = scmp.eq.s32.totalorder %s25, 7
    %p69 = por %p67, %p68
    %p70 = scmp.ne.s32.totalorder %s59, %s60
    %p71 = scmp.eq.s32.totalorder %s25, 0
    %p72 = por %p70, %p71
    %p73 = scmp.ne.s32.totalorder %s59, %s60
    %p74 = scmp.eq.s32.totalorder %s26, 7
    %p75 = por %p73, %p74
    %p77 = scmp.ne.s32.totalorder %s60, %s76
    %p78 = scmp.eq.s32.totalorder %s26, 0
    %p79 = por %p77, %p78
    %s81 = sadd.s32 %s80, 1
    %p84 = scmp.eq.s32.totalorder %s20, 7
    %p85 = scmp.ne.s32.totalorder %s80, %s82
    %p86 = scmp.eq.s32.totalorder %s20, 0
    %p87 = por %p85, %p86
    %p88 = scmp.ne.s32.totalorder %s80, %s82
    %p89 = scmp.eq.s32.totalorder %s25, 7
    %p90 = por %p88, %p89
    %p91 = scmp.ne.s32.totalorder %s82, %s83
    %p92 = scmp.eq.s32.totalorder %s25, 0
    %p93 = por %p91, %p92
    %p94 = scmp.ne.s32.totalorder %s82, %s83
    %p95 = scmp.eq.s32.totalorder %s26, 7
    %p96 = por %p94, %p95
    %p98 = scmp.ne.s32.totalorder %s83, %s97
    %p99 = scmp.eq.s32.totalorder %s26, 0
    %p100 = por %p98, %p99
    %s102 = sadd.s32 %s101, 1
    %p105 = scmp.eq.s32.totalorder %s20, 7
    %p106 = scmp.ne.s32.totalorder %s101, %s103
    %p107 = scmp.eq.s32.totalorder %s20, 0
    %p108 = por %p106, %p107
    %p109 = scmp.ne.s32.totalorder %s101, %s103
    %p110 = scmp.eq.s32.totalorder %s25, 7
    %p111 = por %p109, %p110
    %p112 = scmp.ne.s32.totalorder %s103, %s104
    %p113 = scmp.eq.s32.totalorder %s25, 0
    %p114 = por %p112, %p113
    %p115 = scmp.ne.s32.totalorder %s103, %s104
    %p116 = scmp.eq.s32.totalorder %s26, 7
    %p117 = por %p115, %p116
    %p119 = scmp.ne.s32.totalorder %s104, %s118
    %p120 = scmp.eq.s32.totalorder %s26, 0
    %p121 = por %p119, %p120
    %s123 = sadd.s32 %s122, 1
    %p126 = scmp.eq.s32.totalorder %s20, 7
    %p127 = scmp.ne.s32.totalorder %s122, %s124
    %p128 = scmp.eq.s32.totalorder %s20, 0
    %p129 = por %p127, %p128
    %p130 = scmp.ne.s32.totalorder %s122, %s124
    %p131 = scmp.eq.s32.totalorder %s25, 7
    %p132 = por %p130, %p131
    %p133 = scmp.ne.s32.totalorder %s124, %s125
    %p134 = scmp.eq.s32.totalorder %s25, 0
    %p135 = por %p133, %p134
    %p136 = scmp.ne.s32.totalorder %s124, %s125
    %p137 = scmp.eq.s32.totalorder %s26, 7
    %p138 = por %p136, %p137
    %p140 = scmp.ne.s32.totalorder %s125, %s139
    %p141 = scmp.eq.s32.totalorder %s26, 0
    %p142 = por %p140, %p141
    %s144 = sadd.s32 %s143, 1
    %p147 = scmp.eq.s32.totalorder %s20, 7
    %p148 = scmp.ne.s32.totalorder %s143, %s145
    %p149 = scmp.eq.s32.totalorder %s20, 0
    %p150 = por %p148, %p149
    %p151 = scmp.ne.s32.totalorder %s143, %s145
    %p152 = scmp.eq.s32.totalorder %s25, 7
    %p153 = por %p151, %p152
    %p154 = scmp.ne.s32.totalorder %s145, %s146
    %p155 = scmp.eq.s32.totalorder %s25, 0
    %p156 = por %p154, %p155
    %p157 = scmp.ne.s32.totalorder %s145, %s146
    %p158 = scmp.eq.s32.totalorder %s26, 7
    %p159 = por %p157, %p158
    %p161 = scmp.ne.s32.totalorder %s146, %s160
    %p162 = scmp.eq.s32.totalorder %s26, 0
    %p163 = por %p161, %p162
    %s165 = sadd.s32 %s164, 1
    %p168 = scmp.eq.s32.totalorder %s20, 7
    %p169 = scmp.ne.s32.totalorder %s164, %s166
    %p170 = scmp.eq.s32.totalorder %s20, 0
    %p171 = por %p169, %p170
    %p172 = scmp.ne.s32.totalorder %s164, %s166
    %p173 = scmp.eq.s32.totalorder %s25, 7
    %p174 = por %p172, %p173
    %p175 = scmp.ne.s32.totalorder %s166, %s167
    %p176 = scmp.eq.s32.totalorder %s25, 0
    %p177 = por %p175, %p176
    %p178 = scmp.ne.s32.totalorder %s166, %s167
    %p179 = scmp.eq.s32.totalorder %s26, 7
    %p180 = por %p178, %p179
    %p182 = scmp.ne.s32.totalorder %s167, %s181
    %p183 = scmp.eq.s32.totalorder %s26, 0
    %p184 = por %p182, %p183
    %s186 = sadd.s32 %s185, 1
    %p189 = scmp.eq.s32.totalorder %s20, 7
    %p190 = scmp.ne.s32.totalorder %s185, %s187
    %p191 = scmp.eq.s32.totalorder %s20, 0
    %p192 = por %p190, %p191
    %p193 = scmp.ne.s32.totalorder %s185, %s187
    %p194 = scmp.eq.s32.totalorder %s25, 7
    %p195 = por %p193, %p194
    %p196 = scmp.ne.s32.totalorder %s187, %s188
    %p197 = scmp.eq.s32.totalorder %s25, 0
    %p198 = por %p196, %p197
    %p199 = scmp.ne.s32.totalorder %s187, %s188
    %p200 = scmp.eq.s32.totalorder %s26, 7
    %p201 = por %p199, %p200
    %p203 = scmp.ne.s32.totalorder %s188, %s202
    %p204 = scmp.eq.s32.totalorder %s26, 0
    %p205 = por %p203, %p204
    %s207 = sadd.s32 %s206, 1
    %p210 = scmp.eq.s32.totalorder %s20, 7
    %p211 = scmp.ne.s32.totalorder %s206, %s208
    %p212 = scmp.eq.s32.totalorder %s20, 0
    %p213 = por %p211, %p212
    %p214 = scmp.ne.s32.totalorder %s206, %s208
    %p215 = scmp.eq.s32.totalorder %s25, 7
    %p216 = por %p214, %p215
    %p217 = scmp.ne.s32.totalorder %s208, %s209
    %p218 = scmp.eq.s32.totalorder %s25, 0
    %p219 = por %p217, %p218
    %p220 = scmp.ne.s32.totalorder %s208, %s209
    %p221 = scmp.eq.s32.totalorder %s26, 7
    %p222 = por %p220, %p221
    %p224 = scmp.ne.s32.totalorder %s209, %s223
    %p225 = scmp.eq.s32.totalorder %s26, 0
    %p226 = por %p224, %p225
    %s228 = sadd.s32 %s227, 1
    %p231 = scmp.eq.s32.totalorder %s20, 7
    %p232 = scmp.ne.s32.totalorder %s227, %s229
    %p233 = scmp.eq.s32.totalorder %s20, 0
    %p234 = por %p232, %p233
    %p235 = scmp.ne.s32.totalorder %s227, %s229
    %p236 = scmp.eq.s32.totalorder %s25, 7
    %p237 = por %p235, %p236
    %p238 = scmp.ne.s32.totalorder %s229, %s230
    %p239 = scmp.eq.s32.totalorder %s25, 0
    %p240 = por %p238, %p239
    %p241 = scmp.ne.s32.totalorder %s229, %s230
    %p242 = scmp.eq.s32.totalorder %s26, 7
    %p243 = por %p241, %p242
    %p245 = scmp.ne.s32.totalorder %s230, %s244
    %p246 = scmp.eq.s32.totalorder %s26, 0
    %p247 = por %p245, %p246
    %s248 = ssub.s32 %s20, %s27
    %p249 = scmp.eq.s32.totalorder %s248, 0
    %s251 = sadd.s32 %s250, 1
    %s252 = scalar_select %p249, %s250, %s251
    %p255 = pneg %p249
    %p256 = scmp.eq.s32.totalorder %s20, 7
    %p257 = por %p255, %p256
    %p258 = scmp.ne.s32.totalorder %s250, %s253
    %p259 = scmp.eq.s32.totalorder %s20, 0
    %p260 = por %p258, %p259
    %p261 = scmp.ne.s32.totalorder %s250, %s253
    %p262 = scmp.eq.s32.totalorder %s25, 7
    %p263 = por %p261, %p262
    %p264 = scmp.ne.s32.totalorder %s253, %s254
    %p265 = scmp.eq.s32.totalorder %s25, 0
    %p266 = por %p264, %p265
    %p267 = scmp.ne.s32.totalorder %s253, %s254
    %p268 = scmp.eq.s32.totalorder %s26, 7
    %p269 = por %p267, %p268
    %p271 = scmp.ne.s32.totalorder %s254, %s270
    %p272 = scmp.eq.s32.totalorder %s26, 0
    %p273 = por %p271, %p272
    %s274 = ssub.s32 %s20, %s27
    %p275 = scmp.eq.s32.totalorder %s274, 0
    %s277 = sadd.s32 %s276, 1
    %s278 = scalar_select %p275, %s276, %s277
    %p281 = pneg %p275
    %p282 = scmp.eq.s32.totalorder %s20, 7
    %p283 = por %p281, %p282
    %p284 = scmp.ne.s32.totalorder %s276, %s279
    %p285 = scmp.eq.s32.totalorder %s20, 0
    %p286 = por %p284, %p285
    %p287 = scmp.ne.s32.totalorder %s276, %s279
    %p288 = scmp.eq.s32.totalorder %s25, 7
    %p289 = por %p287, %p288
    %p290 = scmp.ne.s32.totalorder %s279, %s280
    %p291 = scmp.eq.s32.totalorder %s25, 0
    %p292 = por %p290, %p291
    %p293 = scmp.ne.s32.totalorder %s279, %s280
    %p294 = scmp.eq.s32.totalorder %s26, 7
    %p295 = por %p293, %p294
    %p297 = scmp.ne.s32.totalorder %s280, %s296
    %p298 = scmp.eq.s32.totalorder %s26, 0
    %p299 = por %p297, %p298
    %s300 = ssub.s32 %s20, %s27
    %p301 = scmp.eq.s32.totalorder %s300, 0
    %s303 = sadd.s32 %s302, 1
    %s304 = scalar_select %p301, %s302, %s303
    %p307 = pneg %p301
    %p308 = scmp.eq.s32.totalorder %s20, 7
    %p309 = por %p307, %p308
    %p310 = scmp.ne.s32.totalorder %s302, %s305
    %p311 = scmp.eq.s32.totalorder %s20, 0
    %p312 = por %p310, %p311
    %p313 = scmp.ne.s32.totalorder %s302, %s305
    %p314 = scmp.eq.s32.totalorder %s25, 7
    %p315 = por %p313, %p314
    %p316 = scmp.ne.s32.totalorder %s305, %s306
    %p317 = scmp.eq.s32.totalorder %s25, 0
    %p318 = por %p316, %p317
    %p319 = scmp.ne.s32.totalorder %s305, %s306
    %p320 = scmp.eq.s32.totalorder %s26, 7
    %p321 = por %p319, %p320
    %p323 = scmp.ne.s32.totalorder %s306, %s322
    %p324 = scmp.eq.s32.totalorder %s26, 0
    %p325 = por %p323, %p324
    %s326 = ssub.s32 %s20, %s27
    %p327 = scmp.eq.s32.totalorder %s326, 0
    %s329 = sadd.s32 %s328, 1
    %s330 = scalar_select %p327, %s328, %s329
    %p333 = pneg %p327
    %p334 = scmp.eq.s32.totalorder %s20, 7
    %p335 = por %p333, %p334
    %p336 = scmp.ne.s32.totalorder %s328, %s331
    %p337 = scmp.eq.s32.totalorder %s20, 0
    %p338 = por %p336, %p337
    %p339 = scmp.ne.s32.totalorder %s328, %s331
    %p340 = scmp.eq.s32.totalorder %s25, 7
    %p341 = por %p339, %p340
    %p342 = scmp.ne.s32.totalorder %s331, %s332
    %p343 = scmp.eq.s32.totalorder %s25, 0
    %p344 = por %p342, %p343
    %p345 = scmp.ne.s32.totalorder %s331, %s332
    %p346 = scmp.eq.s32.totalorder %s26, 7
    %p347 = por %p345, %p346
    %p349 = scmp.ne.s32.totalorder %s332, %s348
    %p350 = scmp.eq.s32.totalorder %s26, 0
    %p351 = por %p349, %p350
    %p352 = scmp.le.s32.totalorder 1, %s20
    %p353 = scmp.lt.s32.totalorder %s20, 9
    %p354 = pnand %p352, %p353
    %p355 = pneg %p354
    // Predicated region
    $region9: #{tpu_custom_call.1} parent=5 // pred_check
      _
    $region10: #{tpu_custom_call.1} parent=5 // pred_check_branch
      %357 = sbr.rel (%p354) target = $region12
    $region11: #{tpu_custom_call.1} parent=5 // pred_region
      %s358 = ssub.s32 %s20, 1
      // Predicated region
      $region13: #{tpu_custom_call.1} parent=11 // pred_check
        %p359 = pneg %p93
      $region14: #{tpu_custom_call.1} parent=11 // pred_check_branch
        %361 = sbr.rel (%p359) target = $region16
      $region15: #{tpu_custom_call.1} parent=11 // pred_region
        _
      $region16: #{tpu_custom_call.1} parent=11 // pred_fallthru
        _
      // Predicated region
      $region17: #{tpu_custom_call.1} parent=11 // pred_check
        %p362 = pneg %p114
      $region18: #{tpu_custom_call.1} parent=11 // pred_check_branch
        %364 = sbr.rel (%p362) target = $region20
      $region19: #{tpu_custom_call.1} parent=11 // pred_region
        _
      $region20: #{tpu_custom_call.1} parent=11 // pred_fallthru
        _
      // Predicated region
      $region21: #{tpu_custom_call.1} parent=11 // pred_check
        %p365 = pneg %p135
      $region22: #{tpu_custom_call.1} parent=11 // pred_check_branch
        %367 = sbr.rel (%p365) target = $region24
      $region23: #{tpu_custom_call.1} parent=11 // pred_region
        _
      $region24: #{tpu_custom_call.1} parent=11 // pred_fallthru
        _
      // Predicated region
      $region25: #{tpu_custom_call.1} parent=11 // pred_check
        %p368 = pneg %p156
      $region26: #{tpu_custom_call.1} parent=11 // pred_check_branch
        %370 = sbr.rel (%p368) target = $region28
      $region27: #{tpu_custom_call.1} parent=11 // pred_region
        _
      $region28: #{tpu_custom_call.1} parent=11 // pred_fallthru
        _
      // Predicated region
      $region29: #{tpu_custom_call.1} parent=11 // pred_check
        %p371 = pneg %p177
      $region30: #{tpu_custom_call.1} parent=11 // pred_check_branch
        %373 = sbr.rel (%p371) target = $region32
      $region31: #{tpu_custom_call.1} parent=11 // pred_region
        _
      $region32: #{tpu_custom_call.1} parent=11 // pred_fallthru
        _
      // Predicated region
      $region33: #{tpu_custom_call.1} parent=11 // pred_check
        %p374 = pneg %p198
      $region34: #{tpu_custom_call.1} parent=11 // pred_check_branch
        %376 = sbr.rel (%p374) target = $region36
      $region35: #{tpu_custom_call.1} parent=11 // pred_region
        _
      $region36: #{tpu_custom_call.1} parent=11 // pred_fallthru
        _
      // Predicated region
      $region37: #{tpu_custom_call.1} parent=11 // pred_check
        %p377 = pneg %p219
      $region38: #{tpu_custom_call.1} parent=11 // pred_check_branch
        %379 = sbr.rel (%p377) target = $region40
      $region39: #{tpu_custom_call.1} parent=11 // pred_region
        _
      $region40: #{tpu_custom_call.1} parent=11 // pred_fallthru
        _
      // Predicated region
      $region41: #{tpu_custom_call.1} parent=11 // pred_check
        %p380 = pneg %p240
      $region42: #{tpu_custom_call.1} parent=11 // pred_check_branch
        %382 = sbr.rel (%p380) target = $region44
      $region43: #{tpu_custom_call.1} parent=11 // pred_region
        _
      $region44: #{tpu_custom_call.1} parent=11 // pred_fallthru
        _
    $region12: #{tpu_custom_call.1} parent=5 // pred_fallthru
      _
    %p383 = scmp.lt.s32.totalorder %s20, 8
    // Predicated region
    $region45: #{tpu_custom_call.1} parent=5 // pred_check
      %p384 = pneg %p383
    $region46: #{tpu_custom_call.1} parent=5 // pred_check_branch
      %386 = sbr.rel (%p384) target = $region48
    $region47: #{tpu_custom_call.1} parent=5 // pred_region
      // Predicated region
      $region49: #{tpu_custom_call.1} parent=47 // pred_check
        %p387 = pneg %p40
      $region50: #{tpu_custom_call.1} parent=47 // pred_check_branch
        %389 = sbr.rel (%p387) target = $region52
      $region51: #{tpu_custom_call.1} parent=47 // pred_region
        %s390 = smul.u32 4, %s20
        %p391 = scmp.lt.s32.totalorder %s390, 31
        %s392 = scalar_select %p391, %s390, 31
        %s393 = smul.addr %s392, 2
        %s394 = smul.addr %s393, 8
        %s395 = scalar_lea.vmem %s0, %s394
        %s396 = smul.u32 4, %s20
      $region52: #{tpu_custom_call.1} parent=47 // pred_fallthru
        _
      // Predicated region
      $region53: #{tpu_custom_call.1} parent=47 // pred_check
        %p397 = pneg %p66
      $region54: #{tpu_custom_call.1} parent=47 // pred_check_branch
        %399 = sbr.rel (%p397) target = $region56
      $region55: #{tpu_custom_call.1} parent=47 // pred_region
        %s400 = smul.u32 4, %s20
        %p401 = scmp.lt.s32.totalorder %s400, 31
        %s402 = scalar_select %p401, %s400, 31
        %s403 = smul.addr %s402, 2
        %s404 = smul.addr %s403, 8
        %s405 = scalar_lea.vmem %s1, %s404
        %s406 = smul.u32 4, %s20
      $region56: #{tpu_custom_call.1} parent=47 // pred_fallthru
        _
    $region48: #{tpu_custom_call.1} parent=5 // pred_fallthru
      _
    %p407 = scmp.le.s32.totalorder 1, %s20
    %p408 = scmp.lt.s32.totalorder %s20, 9
    %p409 = pnand %p407, %p408
    %p410 = pneg %p409
    // Predicated region
    $region57: #{tpu_custom_call.1} parent=5 // pred_check
      _
    $region58: #{tpu_custom_call.1} parent=5 // pred_check_branch
      %412 = sbr.rel (%p409) target = $region60
    $region59: #{tpu_custom_call.1} parent=5 // pred_region
      %s413 = ssub.s32 %s20, 1
      %s414 = smul.u32 4, %s25
      %p415 = scmp.lt.s32.totalorder %s414, 31
      %s416 = scalar_select %p415, %s414, 31
      %s417 = smul.addr %s416, 2
      %s418 = smul.addr %s417, 8
      %s419 = scalar_lea.vmem %s0, %s418
      %p420 = pneg %p46
      %p421 = pneg %p43
      %s422 = smul.u32 4, %s25
      %p423 = scmp.lt.s32.totalorder %s422, 31
      %s424 = scalar_select %p423, %s422, 31
      %s425 = smul.addr %s424, 2
      %s426 = smul.addr %s425, 8
      %s427 = scalar_lea.vmem %s1, %s426
      %p428 = pneg %p72
      %p429 = pneg %p69
      %p430 = pneg %p93
      %p431 = pneg %p90
      %p432 = pneg %p114
      %p433 = pneg %p111
      %p434 = pneg %p135
      %p435 = pneg %p132
      %p436 = pneg %p156
      %p437 = pneg %p153
      %p438 = pneg %p177
      %p439 = pneg %p174
      %p440 = pneg %p198
      %p441 = pneg %p195
      %p442 = pneg %p219
      %p443 = pneg %p216
      %p444 = pneg %p240
      %p445 = pneg %p237
      %p446 = pneg %p266
      %p447 = pneg %p263
      %s448 = smul.u32 4, %s25
      %p449 = scmp.lt.s32.totalorder %s448, 31
      %s450 = scalar_select %p449, %s448, 31
      %s451 = smul.addr %s450, 2
      %s452 = smul.addr %s451, 8
      %s453 = scalar_lea.vmem %s10, %s452
      %p454 = pneg %p292
      %p455 = pneg %p289
      %s456 = smul.u32 4, %s25
      %p457 = scmp.lt.s32.totalorder %s456, 31
      %s458 = scalar_select %p457, %s456, 31
      %s459 = smul.addr %s458, 2
      %s460 = smul.addr %s459, 8
      %s461 = scalar_lea.vmem %s11, %s460
      %p462 = pneg %p318
      %p463 = pneg %p315
      %s464 = smul.u32 4, %s25
      %p465 = scmp.lt.s32.totalorder %s464, 31
      %s466 = scalar_select %p465, %s464, 31
      %s467 = smul.addr %s466, 2
      %s468 = smul.addr %s467, 8
      %s469 = scalar_lea.vmem %s12, %s468
      %p470 = pneg %p344
      %p471 = pneg %p341
      %s472 = smul.u32 4, %s25
      %p473 = scmp.lt.s32.totalorder %s472, 31
      %s474 = scalar_select %p473, %s472, 31
      %s475 = smul.addr %s474, 2
      %s476 = smul.addr %s475, 8
      %s477 = scalar_lea.vmem %s13, %s476
      %s478 = smul.u32 4, %s25
      %p479 = scmp.lt.s32.totalorder %s478, 31
      %s480 = scalar_select %p479, %s478, 31
      %s481 = smul.addr %s480, 2
      %s482 = smul.addr %s481, 8
      %s483 = scalar_lea.vmem %s0, %s482
      %s484 = smul.u32 4, %s25
      %s485 = smul.u32 4, %s25
      %p486 = scmp.lt.s32.totalorder %s485, 31
      %s487 = scalar_select %p486, %s485, 31
      %s488 = smul.addr %s487, 2
      %s489 = smul.addr %s488, 8
      %s490 = scalar_lea.vmem %s1, %s489
      %s491 = smul.u32 4, %s25
      %s492 = smul.u32 4, %s25
      %p493 = scmp.lt.s32.totalorder %s492, 31
      %s494 = scalar_select %p493, %s492, 31
      %s495 = smul.addr %s494, 2
      %s496 = smul.addr %s495, 8
      %s497 = scalar_lea.vmem %s10, %s496
      %s498 = smul.u32 4, %s25
      %s499 = smul.u32 4, %s25
      %p500 = scmp.lt.s32.totalorder %s499, 31
      %s501 = scalar_select %p500, %s499, 31
      %s502 = smul.addr %s501, 2
      %s503 = smul.addr %s502, 8
      %s504 = scalar_lea.vmem %s11, %s503
      %s505 = smul.u32 4, %s25
      %s506 = smul.u32 4, %s25
      %p507 = scmp.lt.s32.totalorder %s506, 31
      %s508 = scalar_select %p507, %s506, 31
      %s509 = smul.addr %s508, 2
      %s510 = smul.addr %s509, 8
      %s511 = scalar_lea.vmem %s12, %s510
      %s512 = smul.u32 4, %s25
      %s513 = smul.u32 4, %s25
      %p514 = scmp.lt.s32.totalorder %s513, 31
      %s515 = scalar_select %p514, %s513, 31
      %s516 = smul.addr %s515, 2
      %s517 = smul.addr %s516, 8
      %s518 = scalar_lea.vmem %s13, %s517
      %s519 = smul.u32 4, %s25
      %v520 = vld [vmem:[%s483] sm:$0xff]
      %v521 = vld [vmem:[%s483 + $0x8] sm:$0xff]
      %v522 = vld [vmem:[%s483 + $0x10] sm:$0xff]
      %v523 = vld [vmem:[%s483 + $0x18] sm:$0xff]
      %v524 = vld [vmem:[%s483 + $0x20] sm:$0xff]
      %v525 = vld [vmem:[%s483 + $0x28] sm:$0xff]
      %v526 = vld [vmem:[%s483 + $0x30] sm:$0xff]
      %v527 = vld [vmem:[%s483 + $0x38] sm:$0xff]
      %v528 = vld [vmem:[%s490] sm:$0xff]
      %v529 = vld [vmem:[%s490 + $0x8] sm:$0xff]
      %v530 = vld [vmem:[%s490 + $0x10] sm:$0xff]
      %v531 = vld [vmem:[%s490 + $0x18] sm:$0xff]
      %v532 = vld [vmem:[%s490 + $0x20] sm:$0xff]
      %v533 = vld [vmem:[%s490 + $0x28] sm:$0xff]
      %v534 = vld [vmem:[%s490 + $0x30] sm:$0xff]
      %v535 = vld [vmem:[%s490 + $0x38] sm:$0xff]
      %v536 = vld [vmem:[%s2] sm:$0x1]
      %v537 = vld [vmem:[%s3] sm:$0x1]
      %vm538 = vcmask 31744
      %v539 = vsel %vm538, %v520, 0.0
      %540 = vadd.xlane.f32.xlu0 %v539
      %v541 = vpop.xlane.xlu0 %540
      %v542 = vsel %vm538, %v521, 0.0
      %543 = vadd.xlane.f32.xlu0 %v542
      %v544 = vpop.xlane.xlu0 %543
      %v545 = vsel %vm538, %v522, 0.0
      %546 = vadd.xlane.f32.xlu0 %v545
      %v547 = vpop.xlane.xlu0 %546
      %v548 = vsel %vm538, %v523, 0.0
      %549 = vadd.xlane.f32.xlu0 %v548
      %v550 = vpop.xlane.xlu0 %549
      %v551 = vsel %vm538, %v524, 0.0
      %552 = vadd.xlane.f32.xlu0 %v551
      %v553 = vpop.xlane.xlu0 %552
      %v554 = vsel %vm538, %v525, 0.0
      %555 = vadd.xlane.f32.xlu0 %v554
      %v556 = vpop.xlane.xlu0 %555
      %v557 = vsel %vm538, %v526, 0.0
      %558 = vadd.xlane.f32.xlu0 %v557
      %v559 = vpop.xlane.xlu0 %558
      %v560 = vsel %vm538, %v527, 0.0
      %561 = vadd.xlane.f32.xlu0 %v560
      %v562 = vpop.xlane.xlu0 %561
      %v563 = vrcp.pop 4.0
      %v564 = vmul.f32 4.0, %v563
      %v565 = vsub.f32 1.0, %v564
      %v566 = vmul.f32 %v563, %v565
      %v567 = vadd.f32 %v563, %v566
      %vm568 = vweird.f32 %v563
      %v569 = vsel %vm568, %v563, %v567
      %v570 = vmul.f32 %v541, %v569
      %v571 = vmul.f32 %v544, %v569
      %v572 = vmul.f32 %v547, %v569
      %v573 = vmul.f32 %v550, %v569
      %v574 = vmul.f32 %v553, %v569
      %v575 = vmul.f32 %v556, %v569
      %v576 = vmul.f32 %v559, %v569
      %v577 = vmul.f32 %v562, %v569
      %v578 = vsub.f32 %v520, %v570
      %v579 = vsub.f32 %v521, %v571
      %v580 = vsub.f32 %v522, %v572
      %v581 = vsub.f32 %v523, %v573
      %v582 = vsub.f32 %v524, %v574
      %v583 = vsub.f32 %v525, %v575
      %v584 = vsub.f32 %v526, %v576
      %v585 = vsub.f32 %v527, %v577
      %v586 = vmul.f32 %v578, %v578
      %v587 = vmul.f32 %v579, %v579
      %v588 = vmul.f32 %v580, %v580
      %v589 = vmul.f32 %v581, %v581
      %v590 = vmul.f32 %v582, %v582
      %v591 = vmul.f32 %v583, %v583
      %v592 = vmul.f32 %v584, %v584
      %v593 = vmul.f32 %v585, %v585
      %v594 = vsel %vm538, %v586, 0.0
      %595 = vadd.xlane.f32.xlu0 %v594
      %v596 = vpop.xlane.xlu0 %595
      %v597 = vsel %vm538, %v587, 0.0
      %598 = vadd.xlane.f32.xlu0 %v597
      %v599 = vpop.xlane.xlu0 %598
      %v600 = vsel %vm538, %v588, 0.0
      %601 = vadd.xlane.f32.xlu0 %v600
      %v602 = vpop.xlane.xlu0 %601
      %v603 = vsel %vm538, %v589, 0.0
      %604 = vadd.xlane.f32.xlu0 %v603
      %v605 = vpop.xlane.xlu0 %604
      %v606 = vsel %vm538, %v590, 0.0
      %607 = vadd.xlane.f32.xlu0 %v606
      %v608 = vpop.xlane.xlu0 %607
      %v609 = vsel %vm538, %v591, 0.0
      %610 = vadd.xlane.f32.xlu0 %v609
      %v611 = vpop.xlane.xlu0 %610
      %v612 = vsel %vm538, %v592, 0.0
      %613 = vadd.xlane.f32.xlu0 %v612
      %v614 = vpop.xlane.xlu0 %613
      %v615 = vsel %vm538, %v593, 0.0
      %616 = vadd.xlane.f32.xlu0 %v615
      %v617 = vpop.xlane.xlu0 %616
      %v618 = vmul.f32 %v596, %v569
      %v619 = vmul.f32 %v599, %v569
      %v620 = vmul.f32 %v602, %v569
      %v621 = vmul.f32 %v605, %v569
      %v622 = vmul.f32 %v608, %v569
      %v623 = vmul.f32 %v611, %v569
      %v624 = vmul.f32 %v614, %v569
      %v625 = vmul.f32 %v617, %v569
      %v626 = vadd.f32 %v618, 1e-06
      %v627 = vadd.f32 %v619, 1e-06
      %v628 = vadd.f32 %v620, 1e-06
      %v629 = vadd.f32 %v621, 1e-06
      %v630 = vadd.f32 %v622, 1e-06
      %v631 = vadd.f32 %v623, 1e-06
      %v632 = vadd.f32 %v624, 1e-06
      %v633 = vadd.f32 %v625, 1e-06
      %v634 = vrsqrt.pop %v626
      %v635 = vmul.f32 %v634, %v626
      %v636 = vmul.f32 %v635, %v634
      %v637 = vmul.f32 0.5, %v636
      %v638 = vsub.f32 1.5, %v637
      %v639 = vmul.f32 %v634, %v638
      %vm640 = vweird.f32 %v626
      %vm641 = vweird.f32 %v634
      %vm642 = vmor %vm640, %vm641
      %v643 = vsel %vm642, %v634, %v639
      %v644 = vrsqrt.pop %v627
      %v645 = vmul.f32 %v644, %v627
      %v646 = vmul.f32 %v645, %v644
      %v647 = vmul.f32 0.5, %v646
      %v648 = vsub.f32 1.5, %v647
      %v649 = vmul.f32 %v644, %v648
      %vm650 = vweird.f32 %v627
      %vm651 = vweird.f32 %v644
      %vm652 = vmor %vm650, %vm651
      %v653 = vsel %vm652, %v644, %v649
      %v654 = vrsqrt.pop %v628
      %v655 = vmul.f32 %v654, %v628
      %v656 = vmul.f32 %v655, %v654
      %v657 = vmul.f32 0.5, %v656
      %v658 = vsub.f32 1.5, %v657
      %v659 = vmul.f32 %v654, %v658
      %vm660 = vweird.f32 %v628
      %vm661 = vweird.f32 %v654
      %vm662 = vmor %vm660, %vm661
      %v663 = vsel %vm662, %v654, %v659
      %v664 = vrsqrt.pop %v629
      %v665 = vmul.f32 %v664, %v629
      %v666 = vmul.f32 %v665, %v664
      %v667 = vmul.f32 0.5, %v666
      %v668 = vsub.f32 1.5, %v667
      %v669 = vmul.f32 %v664, %v668
      %vm670 = vweird.f32 %v629
      %vm671 = vweird.f32 %v664
      %vm672 = vmor %vm670, %vm671
      %v673 = vsel %vm672, %v664, %v669
      %v674 = vrsqrt.pop %v630
      %v675 = vmul.f32 %v674, %v630
      %v676 = vmul.f32 %v675, %v674
      %v677 = vmul.f32 0.5, %v676
      %v678 = vsub.f32 1.5, %v677
      %v679 = vmul.f32 %v674, %v678
      %vm680 = vweird.f32 %v630
      %vm681 = vweird.f32 %v674
      %vm682 = vmor %vm680, %vm681
      %v683 = vsel %vm682, %v674, %v679
      %v684 = vrsqrt.pop %v631
      %v685 = vmul.f32 %v684, %v631
      %v686 = vmul.f32 %v685, %v684
      %v687 = vmul.f32 0.5, %v686
      %v688 = vsub.f32 1.5, %v687
      %v689 = vmul.f32 %v684, %v688
      %vm690 = vweird.f32 %v631
      %vm691 = vweird.f32 %v684
      %vm692 = vmor %vm690, %vm691
      %v693 = vsel %vm692, %v684, %v689
      %v694 = vrsqrt.pop %v632
      %v695 = vmul.f32 %v694, %v632
      %v696 = vmul.f32 %v695, %v694
      %v697 = vmul.f32 0.5, %v696
      %v698 = vsub.f32 1.5, %v697
      %v699 = vmul.f32 %v694, %v698
      %vm700 = vweird.f32 %v632
      %vm701 = vweird.f32 %v694
      %vm702 = vmor %vm700, %vm701
      %v703 = vsel %vm702, %v694, %v699
      %v704 = vrsqrt.pop %v633
      %v705 = vmul.f32 %v704, %v633
      %v706 = vmul.f32 %v705, %v704
      %v707 = vmul.f32 0.5, %v706
      %v708 = vsub.f32 1.5, %v707
      %v709 = vmul.f32 %v704, %v708
      %vm710 = vweird.f32 %v633
      %vm711 = vweird.f32 %v704
      %vm712 = vmor %vm710, %vm711
      %v713 = vsel %vm712, %v704, %v709
      %v714 = vmul.f32 %v578, %v643
      %v715 = vmul.f32 %v579, %v653
      %v716 = vmul.f32 %v580, %v663
      %v717 = vmul.f32 %v581, %v673
      %v718 = vmul.f32 %v582, %v683
      %v719 = vmul.f32 %v583, %v693
      %v720 = vmul.f32 %v584, %v703
      %v721 = vmul.f32 %v585, %v713
      %v723 = vperm.slane %v536, 0
      %v725 = vmul.f32 %v714, %v723
      %v726 = vmul.f32 %v715, %v723
      %v727 = vmul.f32 %v716, %v723
      %v728 = vmul.f32 %v717, %v723
      %v729 = vmul.f32 %v718, %v723
      %v730 = vmul.f32 %v719, %v723
      %v731 = vmul.f32 %v720, %v723
      %v732 = vmul.f32 %v721, %v723
      %v734 = vperm.slane %v537, 0
      %v736 = vadd.f32 %v725, %v734
      %v737 = vadd.f32 %v726, %v734
      %v738 = vadd.f32 %v727, %v734
      %v739 = vadd.f32 %v728, %v734
      %v740 = vadd.f32 %v729, %v734
      %v741 = vadd.f32 %v730, %v734
      %v742 = vadd.f32 %v731, %v734
      %v743 = vadd.f32 %v732, %v734
      %v744 = vld [vmem:[%s4] sm:$0x1]
      %v745 = vld [vmem:[%s5] sm:$0x1]
      %v746 = vsel %vm538, %v528, 0.0
      %747 = vadd.xlane.f32.xlu0 %v746
      %v748 = vpop.xlane.xlu0 %747
      %v749 = vsel %vm538, %v529, 0.0
      %750 = vadd.xlane.f32.xlu0 %v749
      %v751 = vpop.xlane.xlu0 %750
      %v752 = vsel %vm538, %v530, 0.0
      %753 = vadd.xlane.f32.xlu0 %v752
      %v754 = vpop.xlane.xlu0 %753
      %v755 = vsel %vm538, %v531, 0.0
      %756 = vadd.xlane.f32.xlu0 %v755
      %v757 = vpop.xlane.xlu0 %756
      %v758 = vsel %vm538, %v532, 0.0
      %759 = vadd.xlane.f32.xlu0 %v758
      %v760 = vpop.xlane.xlu0 %759
      %v761 = vsel %vm538, %v533, 0.0
      %762 = vadd.xlane.f32.xlu0 %v761
      %v763 = vpop.xlane.xlu0 %762
      %v764 = vsel %vm538, %v534, 0.0
      %765 = vadd.xlane.f32.xlu0 %v764
      %v766 = vpop.xlane.xlu0 %765
      %v767 = vsel %vm538, %v535, 0.0
      %768 = vadd.xlane.f32.xlu0 %v767
      %v769 = vpop.xlane.xlu0 %768
      %v770 = vmul.f32 %v748, %v569
      %v771 = vmul.f32 %v751, %v569
      %v772 = vmul.f32 %v754, %v569
      %v773 = vmul.f32 %v757, %v569
      %v774 = vmul.f32 %v760, %v569
      %v775 = vmul.f32 %v763, %v569
      %v776 = vmul.f32 %v766, %v569
      %v777 = vmul.f32 %v769, %v569
      %v778 = vsub.f32 %v528, %v770
      %v779 = vsub.f32 %v529, %v771
      %v780 = vsub.f32 %v530, %v772
      %v781 = vsub.f32 %v531, %v773
      %v782 = vsub.f32 %v532, %v774
      %v783 = vsub.f32 %v533, %v775
      %v784 = vsub.f32 %v534, %v776
      %v785 = vsub.f32 %v535, %v777
      %v786 = vmul.f32 %v778, %v778
      %v787 = vmul.f32 %v779, %v779
      %v788 = vmul.f32 %v780, %v780
      %v789 = vmul.f32 %v781, %v781
      %v790 = vmul.f32 %v782, %v782
      %v791 = vmul.f32 %v783, %v783
      %v792 = vmul.f32 %v784, %v784
      %v793 = vmul.f32 %v785, %v785
      %v794 = vsel %vm538, %v786, 0.0
      %795 = vadd.xlane.f32.xlu0 %v794
      %v796 = vpop.xlane.xlu0 %795
      %v797 = vsel %vm538, %v787, 0.0
      %798 = vadd.xlane.f32.xlu0 %v797
      %v799 = vpop.xlane.xlu0 %798
      %v800 = vsel %vm538, %v788, 0.0
      %801 = vadd.xlane.f32.xlu0 %v800
      %v802 = vpop.xlane.xlu0 %801
      %v803 = vsel %vm538, %v789, 0.0
      %804 = vadd.xlane.f32.xlu0 %v803
      %v805 = vpop.xlane.xlu0 %804
      %v806 = vsel %vm538, %v790, 0.0
      %807 = vadd.xlane.f32.xlu0 %v806
      %v808 = vpop.xlane.xlu0 %807
      %v809 = vsel %vm538, %v791, 0.0
      %810 = vadd.xlane.f32.xlu0 %v809
      %v811 = vpop.xlane.xlu0 %810
      %v812 = vsel %vm538, %v792, 0.0
      %813 = vadd.xlane.f32.xlu0 %v812
      %v814 = vpop.xlane.xlu0 %813
      %v815 = vsel %vm538, %v793, 0.0
      %816 = vadd.xlane.f32.xlu0 %v815
      %v817 = vpop.xlane.xlu0 %816
      %v818 = vmul.f32 %v796, %v569
      %v819 = vmul.f32 %v799, %v569
      %v820 = vmul.f32 %v802, %v569
      %v821 = vmul.f32 %v805, %v569
      %v822 = vmul.f32 %v808, %v569
      %v823 = vmul.f32 %v811, %v569
      %v824 = vmul.f32 %v814, %v569
      %v825 = vmul.f32 %v817, %v569
      %v826 = vadd.f32 %v818, 1e-06
      %v827 = vadd.f32 %v819, 1e-06
      %v828 = vadd.f32 %v820, 1e-06
      %v829 = vadd.f32 %v821, 1e-06
      %v830 = vadd.f32 %v822, 1e-06
      %v831 = vadd.f32 %v823, 1e-06
      %v832 = vadd.f32 %v824, 1e-06
      %v833 = vadd.f32 %v825, 1e-06
      %v834 = vrsqrt.pop %v826
      %v835 = vmul.f32 %v834, %v826
      %v836 = vmul.f32 %v835, %v834
      %v837 = vmul.f32 0.5, %v836
      %v838 = vsub.f32 1.5, %v837
      %v839 = vmul.f32 %v834, %v838
      %vm840 = vweird.f32 %v826
      %vm841 = vweird.f32 %v834
      %vm842 = vmor %vm840, %vm841
      %v843 = vsel %vm842, %v834, %v839
      %v844 = vrsqrt.pop %v827
      %v845 = vmul.f32 %v844, %v827
      %v846 = vmul.f32 %v845, %v844
      %v847 = vmul.f32 0.5, %v846
      %v848 = vsub.f32 1.5, %v847
      %v849 = vmul.f32 %v844, %v848
      %vm850 = vweird.f32 %v827
      %vm851 = vweird.f32 %v844
      %vm852 = vmor %vm850, %vm851
      %v853 = vsel %vm852, %v844, %v849
      %v854 = vrsqrt.pop %v828
      %v855 = vmul.f32 %v854, %v828
      %v856 = vmul.f32 %v855, %v854
      %v857 = vmul.f32 0.5, %v856
      %v858 = vsub.f32 1.5, %v857
      %v859 = vmul.f32 %v854, %v858
      %vm860 = vweird.f32 %v828
      %vm861 = vweird.f32 %v854
      %vm862 = vmor %vm860, %vm861
      %v863 = vsel %vm862, %v854, %v859
      %v864 = vrsqrt.pop %v829
      %v865 = vmul.f32 %v864, %v829
      %v866 = vmul.f32 %v865, %v864
      %v867 = vmul.f32 0.5, %v866
      %v868 = vsub.f32 1.5, %v867
      %v869 = vmul.f32 %v864, %v868
      %vm870 = vweird.f32 %v829
      %vm871 = vweird.f32 %v864
      %vm872 = vmor %vm870, %vm871
      %v873 = vsel %vm872, %v864, %v869
      %v874 = vrsqrt.pop %v830
      %v875 = vmul.f32 %v874, %v830
      %v876 = vmul.f32 %v875, %v874
      %v877 = vmul.f32 0.5, %v876
      %v878 = vsub.f32 1.5, %v877
      %v879 = vmul.f32 %v874, %v878
      %vm880 = vweird.f32 %v830
      %vm881 = vweird.f32 %v874
      %vm882 = vmor %vm880, %vm881
      %v883 = vsel %vm882, %v874, %v879
      %v884 = vrsqrt.pop %v831
      %v885 = vmul.f32 %v884, %v831
      %v886 = vmul.f32 %v885, %v884
      %v887 = vmul.f32 0.5, %v886
      %v888 = vsub.f32 1.5, %v887
      %v889 = vmul.f32 %v884, %v888
      %vm890 = vweird.f32 %v831
      %vm891 = vweird.f32 %v884
      %vm892 = vmor %vm890, %vm891
      %v893 = vsel %vm892, %v884, %v889
      %v894 = vrsqrt.pop %v832
      %v895 = vmul.f32 %v894, %v832
      %v896 = vmul.f32 %v895, %v894
      %v897 = vmul.f32 0.5, %v896
      %v898 = vsub.f32 1.5, %v897
      %v899 = vmul.f32 %v894, %v898
      %vm900 = vweird.f32 %v832
      %vm901 = vweird.f32 %v894
      %vm902 = vmor %vm900, %vm901
      %v903 = vsel %vm902, %v894, %v899
      %v904 = vrsqrt.pop %v833
      %v905 = vmul.f32 %v904, %v833
      %v906 = vmul.f32 %v905, %v904
      %v907 = vmul.f32 0.5, %v906
      %v908 = vsub.f32 1.5, %v907
      %v909 = vmul.f32 %v904, %v908
      %vm910 = vweird.f32 %v833
      %vm911 = vweird.f32 %v904
      %vm912 = vmor %vm910, %vm911
      %v913 = vsel %vm912, %v904, %v909
      %v914 = vmul.f32 %v778, %v843
      %v915 = vmul.f32 %v779, %v853
      %v916 = vmul.f32 %v780, %v863
      %v917 = vmul.f32 %v781, %v873
      %v918 = vmul.f32 %v782, %v883
      %v919 = vmul.f32 %v783, %v893
      %v920 = vmul.f32 %v784, %v903
      %v921 = vmul.f32 %v785, %v913
      %v923 = vperm.slane %v744, 0
      %v925 = vmul.f32 %v914, %v923
      %v926 = vmul.f32 %v915, %v923
      %v927 = vmul.f32 %v916, %v923
      %v928 = vmul.f32 %v917, %v923
      %v929 = vmul.f32 %v918, %v923
      %v930 = vmul.f32 %v919, %v923
      %v931 = vmul.f32 %v920, %v923
      %v932 = vmul.f32 %v921, %v923
      %v934 = vperm.slane %v745, 0
      %v936 = vadd.f32 %v925, %v934
      %v937 = vadd.f32 %v926, %v934
      %v938 = vadd.f32 %v927, %v934
      %v939 = vadd.f32 %v928, %v934
      %v940 = vadd.f32 %v929, %v934
      %v941 = vadd.f32 %v930, %v934
      %v942 = vadd.f32 %v931, %v934
      %v943 = vadd.f32 %v932, %v934
      %952 = vrot.lane.b32.xlu0 %v520, 4
      %v953 = vpop.permute.xlu0 %952
      %954 = vrot.lane.b32.xlu0 %v521, 4
      %v955 = vpop.permute.xlu0 %954
      %956 = vrot.lane.b32.xlu0 %v522, 4
      %v957 = vpop.permute.xlu0 %956
      %958 = vrot.lane.b32.xlu0 %v523, 4
      %v959 = vpop.permute.xlu0 %958
      %960 = vrot.lane.b32.xlu0 %v524, 4
      %v961 = vpop.permute.xlu0 %960
      %962 = vrot.lane.b32.xlu0 %v525, 4
      %v963 = vpop.permute.xlu0 %962
      %964 = vrot.lane.b32.xlu0 %v526, 4
      %v965 = vpop.permute.xlu0 %964
      %966 = vrot.lane.b32.xlu0 %v527, 4
      %v967 = vpop.permute.xlu0 %966
      %984 = vrot.lane.b32.xlu0 %v936, 8
      %v985 = vpop.permute.xlu0 %984
      %986 = vrot.lane.b32.xlu0 %v937, 8
      %v987 = vpop.permute.xlu0 %986
      %988 = vrot.lane.b32.xlu0 %v938, 8
      %v989 = vpop.permute.xlu0 %988
      %990 = vrot.lane.b32.xlu0 %v939, 8
      %v991 = vpop.permute.xlu0 %990
      %992 = vrot.lane.b32.xlu0 %v940, 8
      %v993 = vpop.permute.xlu0 %992
      %994 = vrot.lane.b32.xlu0 %v941, 8
      %v995 = vpop.permute.xlu0 %994
      %996 = vrot.lane.b32.xlu0 %v942, 8
      %v997 = vpop.permute.xlu0 %996
      %998 = vrot.lane.b32.xlu0 %v943, 8
      %v999 = vpop.permute.xlu0 %998
      %1016 = vrot.lane.b32.xlu0 %v528, 12
      %v1017 = vpop.permute.xlu0 %1016
      %1018 = vrot.lane.b32.xlu0 %v529, 12
      %v1019 = vpop.permute.xlu0 %1018
      %1020 = vrot.lane.b32.xlu0 %v530, 12
      %v1021 = vpop.permute.xlu0 %1020
      %1022 = vrot.lane.b32.xlu0 %v531, 12
      %v1023 = vpop.permute.xlu0 %1022
      %1024 = vrot.lane.b32.xlu0 %v532, 12
      %v1025 = vpop.permute.xlu0 %1024
      %1026 = vrot.lane.b32.xlu0 %v533, 12
      %v1027 = vpop.permute.xlu0 %1026
      %1028 = vrot.lane.b32.xlu0 %v534, 12
      %v1029 = vpop.permute.xlu0 %1028
      %1030 = vrot.lane.b32.xlu0 %v535, 12
      %v1031 = vpop.permute.xlu0 %1030
      %v1040 = vsel %vm538, %v736, %v953
      %v1041 = vsel %vm538, %v737, %v955
      %v1042 = vsel %vm538, %v738, %v957
      %v1043 = vsel %vm538, %v739, %v959
      %v1044 = vsel %vm538, %v740, %v961
      %v1045 = vsel %vm538, %v741, %v963
      %v1046 = vsel %vm538, %v742, %v965
      %v1047 = vsel %vm538, %v743, %v967
      %vm1048 = vcmask 64512
      %v1049 = vsel %vm1048, %v1040, %v985
      %v1050 = vsel %vm1048, %v1041, %v987
      %v1051 = vsel %vm1048, %v1042, %v989
      %v1052 = vsel %vm1048, %v1043, %v991
      %v1053 = vsel %vm1048, %v1044, %v993
      %v1054 = vsel %vm1048, %v1045, %v995
      %v1055 = vsel %vm1048, %v1046, %v997
      %v1056 = vsel %vm1048, %v1047, %v999
      %vm1057 = vcmask 97280
      %v1058 = vsel %vm1057, %v1049, %v1017
      %v1059 = vsel %vm1057, %v1050, %v1019
      %v1060 = vsel %vm1057, %v1051, %v1021
      %v1061 = vsel %vm1057, %v1052, %v1023
      %v1062 = vsel %vm1057, %v1053, %v1025
      %v1063 = vsel %vm1057, %v1054, %v1027
      %v1064 = vsel %vm1057, %v1055, %v1029
      %v1065 = vsel %vm1057, %v1056, %v1031
      %v1066 = vld [vmem:[%s6] sm:$0xff]
      %v1067 = vld [vmem:[%s6 + $0x8] sm:$0xff]
      %v1068 = vld [vmem:[%s7] sm:$0x1]
      %v1070 = vperm.slane %v1068, 0
      %vm1072 = vcmask 130048
      %v1074 = vsel %vm1072, %v1058, 0
      %v1077 = vsel %vm1072, %v1059, 0
      %v1080 = vsel %vm1072, %v1060, 0
      %v1083 = vsel %vm1072, %v1061, 0
      %v1086 = vsel %vm1072, %v1062, 0
      %v1089 = vsel %vm1072, %v1063, 0
      %v1092 = vsel %vm1072, %v1064, 0
      %v1095 = vsel %vm1072, %v1065, 0
      %1097 = vmatpush.msra.mxu0 0.0
      %1098 = vmatpush.msra.mxu0 0.0
      %1099 = vmatpush.msra.mxu0 0.0
      %1100 = vmatpush.msra.mxu0 0.0
      %1101 = vmatpush.msra.mxu0 0.0
      %1102 = vmatpush.msra.mxu0 0.0
      %1103 = vmatpush.msra.mxu0 0.0
      %1104 = vmatpush.msra.mxu0 0.0
      %1105 = vmatpush.msra.mxu0 0.0
      %1106 = vmatpush.msra.mxu0 0.0
      %1107 = vmatpush.msra.mxu0 0.0
      %1108 = vmatpush.msra.mxu0 0.0
      %1109 = vmatpush.msra.mxu0 0.0
      %1110 = vmatpush.msra.mxu0 0.0
      %1111 = vmatpush.msra.mxu0 %v1067
      %1112 = vmatpush.msra.mxu0 %v1066
      %1113 = vmatmul.f32.gmra.mxu0 %v1074
      %v1114 = vpop.f32.mrf.mxu0
      %v1115 = vadd.f32 %v1070, %v1114
      %1116 = vmatmul.f32.gmra.mxu0 %v1077
      %v1117 = vpop.f32.mrf.mxu0
      %v1118 = vadd.f32 %v1070, %v1117
      %1119 = vmatmul.f32.gmra.mxu0 %v1080
      %v1120 = vpop.f32.mrf.mxu0
      %v1121 = vadd.f32 %v1070, %v1120
      %1122 = vmatmul.f32.gmra.mxu0 %v1083
      %v1123 = vpop.f32.mrf.mxu0
      %v1124 = vadd.f32 %v1070, %v1123
      %1125 = vmatmul.f32.gmra.mxu0 %v1086
      %v1126 = vpop.f32.mrf.mxu0
      %v1127 = vadd.f32 %v1070, %v1126
      %1128 = vmatmul.f32.gmra.mxu0 %v1089
      %v1129 = vpop.f32.mrf.mxu0
      %v1130 = vadd.f32 %v1070, %v1129
      %1131 = vmatmul.f32.gmra.mxu0 %v1092
      %v1132 = vpop.f32.mrf.mxu0
      %v1133 = vadd.f32 %v1070, %v1132
      %1134 = vmatmul.f32.gmra.mxu0 %v1095
      %v1135 = vpop.f32.mrf.mxu0
      %v1136 = vadd.f32 %v1070, %v1135
      %1137 = vdwg.mxu0
      %1140 = vrot.lane.b32.xlu0 %v1115, 120
      %v1141 = vpop.permute.xlu0 %1140
      %1142 = vrot.lane.b32.xlu0 %v1118, 120
      %v1143 = vpop.permute.xlu0 %1142
      %v1144 = vsel %vm538, %v1115, 0
      %v1146 = vsel %vm538, %v1118, 0
      %v1148 = vsel %vm538, %v1141, 0
      %v1150 = vsel %vm538, %v1143, 0
      %1152 = vmatpush.xpose.msra.mxu0 0.0
      %1153 = vmatpush.xpose.msra.mxu0 0.0
      %1154 = vmatpush.xpose.msra.mxu0 0.0
      %1155 = vmatpush.xpose.msra.mxu0 0.0
      %1156 = vmatpush.xpose.msra.mxu0 0.0
      %1157 = vmatpush.xpose.msra.mxu0 0.0
      %1158 = vmatpush.xpose.msra.mxu0 0.0
      %1159 = vmatpush.xpose.msra.mxu0 0.0
      %1160 = vmatpush.xpose.msra.mxu0 0.0
      %1161 = vmatpush.xpose.msra.mxu0 0.0
      %1162 = vmatpush.xpose.msra.mxu0 0.0
      %1163 = vmatpush.xpose.msra.mxu0 0.0
      %1164 = vmatpush.xpose.msra.mxu0 0.0
      %1165 = vmatpush.xpose.msra.mxu0 0.0
      %1166 = vmatpush.xpose.msra.mxu0 %v1150
      %1167 = vmatpush.xpose.msra.mxu0 %v1148
      %1168 = vmatmul.f32.gmra.mxu0 %v1144
      %v1169 = vpop.f32.mrf.mxu0
      %v1170 = vadd.f32 0.0, %v1169
      %1171 = vmatmul.f32.gmra.mxu0 %v1146
      %v1172 = vpop.f32.mrf.mxu0
      %v1173 = vadd.f32 0.0, %v1172
      %1174 = vdwg.mxu0
      %1177 = vrot.lane.b32.xlu0 %v1121, 120
      %v1178 = vpop.permute.xlu0 %1177
      %1179 = vrot.lane.b32.xlu0 %v1124, 120
      %v1180 = vpop.permute.xlu0 %1179
      %v1181 = vsel %vm538, %v1121, 0
      %v1183 = vsel %vm538, %v1124, 0
      %v1185 = vsel %vm538, %v1178, 0
      %v1187 = vsel %vm538, %v1180, 0
      %1189 = vmatpush.xpose.msra.mxu0 0.0
      %1190 = vmatpush.xpose.msra.mxu0 0.0
      %1191 = vmatpush.xpose.msra.mxu0 0.0
      %1192 = vmatpush.xpose.msra.mxu0 0.0
      %1193 = vmatpush.xpose.msra.mxu0 0.0
      %1194 = vmatpush.xpose.msra.mxu0 0.0
      %1195 = vmatpush.xpose.msra.mxu0 0.0
      %1196 = vmatpush.xpose.msra.mxu0 0.0
      %1197 = vmatpush.xpose.msra.mxu0 0.0
      %1198 = vmatpush.xpose.msra.mxu0 0.0
      %1199 = vmatpush.xpose.msra.mxu0 0.0
      %1200 = vmatpush.xpose.msra.mxu0 0.0
      %1201 = vmatpush.xpose.msra.mxu0 0.0
      %1202 = vmatpush.xpose.msra.mxu0 0.0
      %1203 = vmatpush.xpose.msra.mxu0 %v1187
      %1204 = vmatpush.xpose.msra.mxu0 %v1185
      %1205 = vmatmul.f32.gmra.mxu0 %v1181
      %v1206 = vpop.f32.mrf.mxu0
      %v1207 = vadd.f32 0.0, %v1206
      %1208 = vmatmul.f32.gmra.mxu0 %v1183
      %v1209 = vpop.f32.mrf.mxu0
      %v1210 = vadd.f32 0.0, %v1209
      %1211 = vdwg.mxu0
      %1214 = vrot.lane.b32.xlu0 %v1127, 120
      %v1215 = vpop.permute.xlu0 %1214
      %1216 = vrot.lane.b32.xlu0 %v1130, 120
      %v1217 = vpop.permute.xlu0 %1216
      %v1218 = vsel %vm538, %v1127, 0
      %v1220 = vsel %vm538, %v1130, 0
      %v1222 = vsel %vm538, %v1215, 0
      %v1224 = vsel %vm538, %v1217, 0
      %1226 = vmatpush.xpose.msra.mxu0 0.0
      %1227 = vmatpush.xpose.msra.mxu0 0.0
      %1228 = vmatpush.xpose.msra.mxu0 0.0
      %1229 = vmatpush.xpose.msra.mxu0 0.0
      %1230 = vmatpush.xpose.msra.mxu0 0.0
      %1231 = vmatpush.xpose.msra.mxu0 0.0
      %1232 = vmatpush.xpose.msra.mxu0 0.0
      %1233 = vmatpush.xpose.msra.mxu0 0.0
      %1234 = vmatpush.xpose.msra.mxu0 0.0
      %1235 = vmatpush.xpose.msra.mxu0 0.0
      %1236 = vmatpush.xpose.msra.mxu0 0.0
      %1237 = vmatpush.xpose.msra.mxu0 0.0
      %1238 = vmatpush.xpose.msra.mxu0 0.0
      %1239 = vmatpush.xpose.msra.mxu0 0.0
      %1240 = vmatpush.xpose.msra.mxu0 %v1224
      %1241 = vmatpush.xpose.msra.mxu0 %v1222
      %1242 = vmatmul.f32.gmra.mxu0 %v1218
      %v1243 = vpop.f32.mrf.mxu0
      %v1244 = vadd.f32 0.0, %v1243
      %1245 = vmatmul.f32.gmra.mxu0 %v1220
      %v1246 = vpop.f32.mrf.mxu0
      %v1247 = vadd.f32 0.0, %v1246
      %1248 = vdwg.mxu0
      %1251 = vrot.lane.b32.xlu0 %v1133, 120
      %v1252 = vpop.permute.xlu0 %1251
      %1253 = vrot.lane.b32.xlu0 %v1136, 120
      %v1254 = vpop.permute.xlu0 %1253
      %v1255 = vsel %vm538, %v1133, 0
      %v1257 = vsel %vm538, %v1136, 0
      %v1259 = vsel %vm538, %v1252, 0
      %v1261 = vsel %vm538, %v1254, 0
      %1263 = vmatpush.xpose.msra.mxu0 0.0
      %1264 = vmatpush.xpose.msra.mxu0 0.0
      %1265 = vmatpush.xpose.msra.mxu0 0.0
      %1266 = vmatpush.xpose.msra.mxu0 0.0
      %1267 = vmatpush.xpose.msra.mxu0 0.0
      %1268 = vmatpush.xpose.msra.mxu0 0.0
      %1269 = vmatpush.xpose.msra.mxu0 0.0
      %1270 = vmatpush.xpose.msra.mxu0 0.0
      %1271 = vmatpush.xpose.msra.mxu0 0.0
      %1272 = vmatpush.xpose.msra.mxu0 0.0
      %1273 = vmatpush.xpose.msra.mxu0 0.0
      %1274 = vmatpush.xpose.msra.mxu0 0.0
      %1275 = vmatpush.xpose.msra.mxu0 0.0
      %1276 = vmatpush.xpose.msra.mxu0 0.0
      %1277 = vmatpush.xpose.msra.mxu0 %v1261
      %1278 = vmatpush.xpose.msra.mxu0 %v1259
      %1279 = vmatmul.f32.gmra.mxu0 %v1255
      %v1280 = vpop.f32.mrf.mxu0
      %v1281 = vadd.f32 0.0, %v1280
      %1282 = vmatmul.f32.gmra.mxu0 %v1257
      %v1283 = vpop.f32.mrf.mxu0
      %v1284 = vadd.f32 0.0, %v1283
      %1285 = vdwg.mxu0
      %1286 = vst.msk [vmem:[%s511] sm:$0xff] %vm1072, %v1170
      %1287 = vst.msk [vmem:[%s511 + $0x8] sm:$0xff] %vm1072, %v1173
      %1288 = vst.msk [vmem:[%s511 + $0x10] sm:$0xff] %vm1072, %v1207
      %1289 = vst.msk [vmem:[%s511 + $0x18] sm:$0xff] %vm1072, %v1210
      %1290 = vst.msk [vmem:[%s511 + $0x20] sm:$0xff] %vm1072, %v1244
      %1291 = vst.msk [vmem:[%s511 + $0x28] sm:$0xff] %vm1072, %v1247
      %1292 = vst.msk [vmem:[%s511 + $0x30] sm:$0xff] %vm1072, %v1281
      %1293 = vst.msk [vmem:[%s511 + $0x38] sm:$0xff] %vm1072, %v1284
      %v1294 = vsel %vm1072, %v1170, -inf
      %1295 = vmax.xlane.f32.xlu0 %v1294
      %v1296 = vpop.xlane.xlu0 %1295
      %v1297 = vsel %vm1072, %v1173, -inf
      %1298 = vmax.xlane.f32.xlu0 %v1297
      %v1299 = vpop.xlane.xlu0 %1298
      %v1300 = vsel %vm1072, %v1207, -inf
      %1301 = vmax.xlane.f32.xlu0 %v1300
      %v1302 = vpop.xlane.xlu0 %1301
      %v1303 = vsel %vm1072, %v1210, -inf
      %1304 = vmax.xlane.f32.xlu0 %v1303
      %v1305 = vpop.xlane.xlu0 %1304
      %v1306 = vsel %vm1072, %v1244, -inf
      %1307 = vmax.xlane.f32.xlu0 %v1306
      %v1308 = vpop.xlane.xlu0 %1307
      %v1309 = vsel %vm1072, %v1247, -inf
      %1310 = vmax.xlane.f32.xlu0 %v1309
      %v1311 = vpop.xlane.xlu0 %1310
      %v1312 = vsel %vm1072, %v1281, -inf
      %1313 = vmax.xlane.f32.xlu0 %v1312
      %v1314 = vpop.xlane.xlu0 %1313
      %v1315 = vsel %vm1072, %v1284, -inf
      %1316 = vmax.xlane.f32.xlu0 %v1315
      %v1317 = vpop.xlane.xlu0 %1316
      %v1318 = vsub.f32 %v1170, %v1296
      %v1319 = vsub.f32 %v1173, %v1299
      %v1320 = vsub.f32 %v1207, %v1302
      %v1321 = vsub.f32 %v1210, %v1305
      %v1322 = vsub.f32 %v1244, %v1308
      %v1323 = vsub.f32 %v1247, %v1311
      %v1324 = vsub.f32 %v1281, %v1314
      %v1325 = vsub.f32 %v1284, %v1317
      %v1326 = vmul.f32 %v1318, 1.442695
      %v1327 = vpow.pop %v1326
      %v1328 = vmul.f32 %v1319, 1.442695
      %v1329 = vpow.pop %v1328
      %v1330 = vmul.f32 %v1320, 1.442695
      %v1331 = vpow.pop %v1330
      %v1332 = vmul.f32 %v1321, 1.442695
      %v1333 = vpow.pop %v1332
      %v1334 = vmul.f32 %v1322, 1.442695
      %v1335 = vpow.pop %v1334
      %v1336 = vmul.f32 %v1323, 1.442695
      %v1337 = vpow.pop %v1336
      %v1338 = vmul.f32 %v1324, 1.442695
      %v1339 = vpow.pop %v1338
      %v1340 = vmul.f32 %v1325, 1.442695
      %v1341 = vpow.pop %v1340
      %v1342 = vsel %vm1072, %v1327, 0.0
      %1343 = vadd.xlane.f32.xlu0 %v1342
      %v1344 = vpop.xlane.xlu0 %1343
      %v1345 = vsel %vm1072, %v1329, 0.0
      %1346 = vadd.xlane.f32.xlu0 %v1345
      %v1347 = vpop.xlane.xlu0 %1346
      %v1348 = vsel %vm1072, %v1331, 0.0
      %1349 = vadd.xlane.f32.xlu0 %v1348
      %v1350 = vpop.xlane.xlu0 %1349
      %v1351 = vsel %vm1072, %v1333, 0.0
      %1352 = vadd.xlane.f32.xlu0 %v1351
      %v1353 = vpop.xlane.xlu0 %1352
      %v1354 = vsel %vm1072, %v1335, 0.0
      %1355 = vadd.xlane.f32.xlu0 %v1354
      %v1356 = vpop.xlane.xlu0 %1355
      %v1357 = vsel %vm1072, %v1337, 0.0
      %1358 = vadd.xlane.f32.xlu0 %v1357
      %v1359 = vpop.xlane.xlu0 %1358
      %v1360 = vsel %vm1072, %v1339, 0.0
      %1361 = vadd.xlane.f32.xlu0 %v1360
      %v1362 = vpop.xlane.xlu0 %1361
      %v1363 = vsel %vm1072, %v1341, 0.0
      %1364 = vadd.xlane.f32.xlu0 %v1363
      %v1365 = vpop.xlane.xlu0 %1364
      %v1366 = vrcp.pop %v1344
      %v1367 = vrcp.pop %v1347
      %v1368 = vrcp.pop %v1350
      %v1369 = vrcp.pop %v1353
      %v1370 = vrcp.pop %v1356
      %v1371 = vrcp.pop %v1359
      %v1372 = vrcp.pop %v1362
      %v1373 = vrcp.pop %v1365
      %v1374 = vmul.f32 %v1327, %v1366
      %v1375 = vmul.f32 %v1329, %v1367
      %v1376 = vmul.f32 %v1331, %v1368
      %v1377 = vmul.f32 %v1333, %v1369
      %v1378 = vmul.f32 %v1335, %v1370
      %v1379 = vmul.f32 %v1337, %v1371
      %v1380 = vmul.f32 %v1339, %v1372
      %v1381 = vmul.f32 %v1341, %v1373
      %1382 = vrot.lane.b32.xlu0 %v1115, 116
      %v1383 = vpop.permute.xlu0 %1382
      %1384 = vrot.lane.b32.xlu0 %v1118, 116
      %v1385 = vpop.permute.xlu0 %1384
      %v1389 = vsel %vm1072, %v1374, 0
      %v1392 = vsel %vm1072, %v1375, 0
      %1394 = vmatpush.msra.mxu0 0.0
      %1395 = vmatpush.msra.mxu0 0.0
      %1396 = vmatpush.msra.mxu0 0.0
      %1397 = vmatpush.msra.mxu0 0.0
      %1398 = vmatpush.msra.mxu0 0.0
      %1399 = vmatpush.msra.mxu0 0.0
      %1400 = vmatpush.msra.mxu0 0.0
      %1401 = vmatpush.msra.mxu0 0.0
      %1402 = vmatpush.msra.mxu0 0.0
      %1403 = vmatpush.msra.mxu0 0.0
      %1404 = vmatpush.msra.mxu0 0.0
      %1405 = vmatpush.msra.mxu0 0.0
      %1406 = vmatpush.msra.mxu0 0.0
      %1407 = vmatpush.msra.mxu0 0.0
      %1408 = vmatpush.msra.mxu0 %v1385
      %1409 = vmatpush.msra.mxu0 %v1383
      %1410 = vmatmul.f32.gmra.mxu0 %v1389
      %v1411 = vpop.f32.mrf.mxu0
      %v1412 = vadd.f32 0.0, %v1411
      %1413 = vmatmul.f32.gmra.mxu0 %v1392
      %v1414 = vpop.f32.mrf.mxu0
      %v1415 = vadd.f32 0.0, %v1414
      %1416 = vdwg.mxu0
      %1417 = vrot.lane.b32.xlu0 %v1121, 116
      %v1418 = vpop.permute.xlu0 %1417
      %1419 = vrot.lane.b32.xlu0 %v1124, 116
      %v1420 = vpop.permute.xlu0 %1419
      %v1424 = vsel %vm1072, %v1376, 0
      %v1427 = vsel %vm1072, %v1377, 0
      %1429 = vmatpush.msra.mxu0 0.0
      %1430 = vmatpush.msra.mxu0 0.0
      %1431 = vmatpush.msra.mxu0 0.0
      %1432 = vmatpush.msra.mxu0 0.0
      %1433 = vmatpush.msra.mxu0 0.0
      %1434 = vmatpush.msra.mxu0 0.0
      %1435 = vmatpush.msra.mxu0 0.0
      %1436 = vmatpush.msra.mxu0 0.0
      %1437 = vmatpush.msra.mxu0 0.0
      %1438 = vmatpush.msra.mxu0 0.0
      %1439 = vmatpush.msra.mxu0 0.0
      %1440 = vmatpush.msra.mxu0 0.0
      %1441 = vmatpush.msra.mxu0 0.0
      %1442 = vmatpush.msra.mxu0 0.0
      %1443 = vmatpush.msra.mxu0 %v1420
      %1444 = vmatpush.msra.mxu0 %v1418
      %1445 = vmatmul.f32.gmra.mxu0 %v1424
      %v1446 = vpop.f32.mrf.mxu0
      %v1447 = vadd.f32 0.0, %v1446
      %1448 = vmatmul.f32.gmra.mxu0 %v1427
      %v1449 = vpop.f32.mrf.mxu0
      %v1450 = vadd.f32 0.0, %v1449
      %1451 = vdwg.mxu0
      %1452 = vrot.lane.b32.xlu0 %v1127, 116
      %v1453 = vpop.permute.xlu0 %1452
      %1454 = vrot.lane.b32.xlu0 %v1130, 116
      %v1455 = vpop.permute.xlu0 %1454
      %v1459 = vsel %vm1072, %v1378, 0
      %v1462 = vsel %vm1072, %v1379, 0
      %1464 = vmatpush.msra.mxu0 0.0
      %1465 = vmatpush.msra.mxu0 0.0
      %1466 = vmatpush.msra.mxu0 0.0
      %1467 = vmatpush.msra.mxu0 0.0
      %1468 = vmatpush.msra.mxu0 0.0
      %1469 = vmatpush.msra.mxu0 0.0
      %1470 = vmatpush.msra.mxu0 0.0
      %1471 = vmatpush.msra.mxu0 0.0
      %1472 = vmatpush.msra.mxu0 0.0
      %1473 = vmatpush.msra.mxu0 0.0
      %1474 = vmatpush.msra.mxu0 0.0
      %1475 = vmatpush.msra.mxu0 0.0
      %1476 = vmatpush.msra.mxu0 0.0
      %1477 = vmatpush.msra.mxu0 0.0
      %1478 = vmatpush.msra.mxu0 %v1455
      %1479 = vmatpush.msra.mxu0 %v1453
      %1480 = vmatmul.f32.gmra.mxu0 %v1459
      %v1481 = vpop.f32.mrf.mxu0
      %v1482 = vadd.f32 0.0, %v1481
      %1483 = vmatmul.f32.gmra.mxu0 %v1462
      %v1484 = vpop.f32.mrf.mxu0
      %v1485 = vadd.f32 0.0, %v1484
      %1486 = vdwg.mxu0
      %1487 = vrot.lane.b32.xlu0 %v1133, 116
      %v1488 = vpop.permute.xlu0 %1487
      %1489 = vrot.lane.b32.xlu0 %v1136, 116
      %v1490 = vpop.permute.xlu0 %1489
      %v1494 = vsel %vm1072, %v1380, 0
      %v1497 = vsel %vm1072, %v1381, 0
      %1499 = vmatpush.msra.mxu0 0.0
      %1500 = vmatpush.msra.mxu0 0.0
      %1501 = vmatpush.msra.mxu0 0.0
      %1502 = vmatpush.msra.mxu0 0.0
      %1503 = vmatpush.msra.mxu0 0.0
      %1504 = vmatpush.msra.mxu0 0.0
      %1505 = vmatpush.msra.mxu0 0.0
      %1506 = vmatpush.msra.mxu0 0.0
      %1507 = vmatpush.msra.mxu0 0.0
      %1508 = vmatpush.msra.mxu0 0.0
      %1509 = vmatpush.msra.mxu0 0.0
      %1510 = vmatpush.msra.mxu0 0.0
      %1511 = vmatpush.msra.mxu0 0.0
      %1512 = vmatpush.msra.mxu0 0.0
      %1513 = vmatpush.msra.mxu0 %v1490
      %1514 = vmatpush.msra.mxu0 %v1488
      %1515 = vmatmul.f32.gmra.mxu0 %v1494
      %v1516 = vpop.f32.mrf.mxu0
      %v1517 = vadd.f32 0.0, %v1516
      %1518 = vmatmul.f32.gmra.mxu0 %v1497
      %v1519 = vpop.f32.mrf.mxu0
      %v1520 = vadd.f32 0.0, %v1519
      %1521 = vdwg.mxu0
      %v1522 = vld [vmem:[%s8] sm:$0x1]
      %v1524 = vperm.slane %v1522, 0
      %v1526 = vmul.f32 %v1412, %v1524
      %v1527 = vmul.f32 %v1415, %v1524
      %v1528 = vmul.f32 %v1447, %v1524
      %v1529 = vmul.f32 %v1450, %v1524
      %v1530 = vmul.f32 %v1482, %v1524
      %v1531 = vmul.f32 %v1485, %v1524
      %v1532 = vmul.f32 %v1517, %v1524
      %v1533 = vmul.f32 %v1520, %v1524
      %v1534 = vadd.f32 %v520, %v1526
      %v1535 = vadd.f32 %v521, %v1527
      %v1536 = vadd.f32 %v522, %v1528
      %v1537 = vadd.f32 %v523, %v1529
      %v1538 = vadd.f32 %v524, %v1530
      %v1539 = vadd.f32 %v525, %v1531
      %v1540 = vadd.f32 %v526, %v1532
      %v1541 = vadd.f32 %v527, %v1533
      %1542 = vst.msk [vmem:[%s497] sm:$0xff] %vm538, %v1534
      %1543 = vst.msk [vmem:[%s497 + $0x8] sm:$0xff] %vm538, %v1535
      %1544 = vst.msk [vmem:[%s497 + $0x10] sm:$0xff] %vm538, %v1536
      %1545 = vst.msk [vmem:[%s497 + $0x18] sm:$0xff] %vm538, %v1537
      %1546 = vst.msk [vmem:[%s497 + $0x20] sm:$0xff] %vm538, %v1538
      %1547 = vst.msk [vmem:[%s497 + $0x28] sm:$0xff] %vm538, %v1539
      %1548 = vst.msk [vmem:[%s497 + $0x30] sm:$0xff] %vm538, %v1540
      %1549 = vst.msk [vmem:[%s497 + $0x38] sm:$0xff] %vm538, %v1541
      %1550 = vxpose.xlu0.b32.start [1/16] %v1170, 128
      %1551 = vxpose.xlu0.b32.cont [2/16] %v1173, 128
      %1552 = vxpose.xlu0.b32.cont [3/16] 0.0, 128
      %1553 = vxpose.xlu0.b32.cont [4/16] 0.0, 128
      %1554 = vxpose.xlu0.b32.cont [5/16] 0.0, 128
      %1555 = vxpose.xlu0.b32.cont [6/16] 0.0, 128
      %1556 = vxpose.xlu0.b32.cont [7/16] 0.0, 128
      %1557 = vxpose.xlu0.b32.cont [8/16] 0.0, 128
      %1558 = vxpose.xlu0.b32.cont [9/16] 0.0, 128
      %1559 = vxpose.xlu0.b32.cont [10/16] 0.0, 128
      %1560 = vxpose.xlu0.b32.cont [11/16] 0.0, 128
      %1561 = vxpose.xlu0.b32.cont [12/16] 0.0, 128
      %1562 = vxpose.xlu0.b32.cont [13/16] 0.0, 128
      %1563 = vxpose.xlu0.b32.cont [14/16] 0.0, 128
      %1564 = vxpose.xlu0.b32.cont [15/16] 0.0, 128
      %1565 = vxpose.xlu0.b32.end [16/16] 0.0, 128
      %v1566 = vpop.trf.xlu0
      %v1567 = vpop.trf.xlu0
      %v1568 = vpop.trf.xlu0
      %v1569 = vpop.trf.xlu0
      %v1570 = vpop.trf.xlu0
      %v1571 = vpop.trf.xlu0
      %v1572 = vpop.trf.xlu0
      %v1573 = vpop.trf.xlu0
      %v1574 = vpop.trf.xlu0
      %v1575 = vpop.trf.xlu0
      %v1576 = vpop.trf.xlu0
      %v1577 = vpop.trf.xlu0
      %v1578 = vpop.trf.xlu0
      %v1579 = vpop.trf.xlu0
      %v1580 = vpop.trf.xlu0
      %v1581 = vpop.trf.xlu0
      %1582 = vxpose.xlu0.b32.start [1/16] %v1207, 128
      %1583 = vxpose.xlu0.b32.cont [2/16] %v1210, 128
      %1584 = vxpose.xlu0.b32.cont [3/16] 0.0, 128
      %1585 = vxpose.xlu0.b32.cont [4/16] 0.0, 128
      %1586 = vxpose.xlu0.b32.cont [5/16] 0.0, 128
      %1587 = vxpose.xlu0.b32.cont [6/16] 0.0, 128
      %1588 = vxpose.xlu0.b32.cont [7/16] 0.0, 128
      %1589 = vxpose.xlu0.b32.cont [8/16] 0.0, 128
      %1590 = vxpose.xlu0.b32.cont [9/16] 0.0, 128
      %1591 = vxpose.xlu0.b32.cont [10/16] 0.0, 128
      %1592 = vxpose.xlu0.b32.cont [11/16] 0.0, 128
      %1593 = vxpose.xlu0.b32.cont [12/16] 0.0, 128
      %1594 = vxpose.xlu0.b32.cont [13/16] 0.0, 128
      %1595 = vxpose.xlu0.b32.cont [14/16] 0.0, 128
      %1596 = vxpose.xlu0.b32.cont [15/16] 0.0, 128
      %1597 = vxpose.xlu0.b32.end [16/16] 0.0, 128
      %v1598 = vpop.trf.xlu0
      %v1599 = vpop.trf.xlu0
      %v1600 = vpop.trf.xlu0
      %v1601 = vpop.trf.xlu0
      %v1602 = vpop.trf.xlu0
      %v1603 = vpop.trf.xlu0
      %v1604 = vpop.trf.xlu0
      %v1605 = vpop.trf.xlu0
      %v1606 = vpop.trf.xlu0
      %v1607 = vpop.trf.xlu0
      %v1608 = vpop.trf.xlu0
      %v1609 = vpop.trf.xlu0
      %v1610 = vpop.trf.xlu0
      %v1611 = vpop.trf.xlu0
      %v1612 = vpop.trf.xlu0
      %v1613 = vpop.trf.xlu0
      %1614 = vxpose.xlu0.b32.start [1/16] %v1244, 128
      %1615 = vxpose.xlu0.b32.cont [2/16] %v1247, 128
      %1616 = vxpose.xlu0.b32.cont [3/16] 0.0, 128
      %1617 = vxpose.xlu0.b32.cont [4/16] 0.0, 128
      %1618 = vxpose.xlu0.b32.cont [5/16] 0.0, 128
      %1619 = vxpose.xlu0.b32.cont [6/16] 0.0, 128
      %1620 = vxpose.xlu0.b32.cont [7/16] 0.0, 128
      %1621 = vxpose.xlu0.b32.cont [8/16] 0.0, 128
      %1622 = vxpose.xlu0.b32.cont [9/16] 0.0, 128
      %1623 = vxpose.xlu0.b32.cont [10/16] 0.0, 128
      %1624 = vxpose.xlu0.b32.cont [11/16] 0.0, 128
      %1625 = vxpose.xlu0.b32.cont [12/16] 0.0, 128
      %1626 = vxpose.xlu0.b32.cont [13/16] 0.0, 128
      %1627 = vxpose.xlu0.b32.cont [14/16] 0.0, 128
      %1628 = vxpose.xlu0.b32.cont [15/16] 0.0, 128
      %1629 = vxpose.xlu0.b32.end [16/16] 0.0, 128
      %v1630 = vpop.trf.xlu0
      %v1631 = vpop.trf.xlu0
      %v1632 = vpop.trf.xlu0
      %v1633 = vpop.trf.xlu0
      %v1634 = vpop.trf.xlu0
      %v1635 = vpop.trf.xlu0
      %v1636 = vpop.trf.xlu0
      %v1637 = vpop.trf.xlu0
      %v1638 = vpop.trf.xlu0
      %v1639 = vpop.trf.xlu0
      %v1640 = vpop.trf.xlu0
      %v1641 = vpop.trf.xlu0
      %v1642 = vpop.trf.xlu0
      %v1643 = vpop.trf.xlu0
      %v1644 = vpop.trf.xlu0
      %v1645 = vpop.trf.xlu0
      %1646 = vxpose.xlu0.b32.start [1/16] %v1281, 128
      %1647 = vxpose.xlu0.b32.cont [2/16] %v1284, 128
      %1648 = vxpose.xlu0.b32.cont [3/16] 0.0, 128
      %1649 = vxpose.xlu0.b32.cont [4/16] 0.0, 128
      %1650 = vxpose.xlu0.b32.cont [5/16] 0.0, 128
      %1651 = vxpose.xlu0.b32.cont [6/16] 0.0, 128
      %1652 = vxpose.xlu0.b32.cont [7/16] 0.0, 128
      %1653 = vxpose.xlu0.b32.cont [8/16] 0.0, 128
      %1654 = vxpose.xlu0.b32.cont [9/16] 0.0, 128
      %1655 = vxpose.xlu0.b32.cont [10/16] 0.0, 128
      %1656 = vxpose.xlu0.b32.cont [11/16] 0.0, 128
      %1657 = vxpose.xlu0.b32.cont [12/16] 0.0, 128
      %1658 = vxpose.xlu0.b32.cont [13/16] 0.0, 128
      %1659 = vxpose.xlu0.b32.cont [14/16] 0.0, 128
      %1660 = vxpose.xlu0.b32.cont [15/16] 0.0, 128
      %1661 = vxpose.xlu0.b32.end [16/16] 0.0, 128
      %v1662 = vpop.trf.xlu0
      %v1663 = vpop.trf.xlu0
      %v1664 = vpop.trf.xlu0
      %v1665 = vpop.trf.xlu0
      %v1666 = vpop.trf.xlu0
      %v1667 = vpop.trf.xlu0
      %v1668 = vpop.trf.xlu0
      %v1669 = vpop.trf.xlu0
      %v1670 = vpop.trf.xlu0
      %v1671 = vpop.trf.xlu0
      %v1672 = vpop.trf.xlu0
      %v1673 = vpop.trf.xlu0
      %v1674 = vpop.trf.xlu0
      %v1675 = vpop.trf.xlu0
      %v1676 = vpop.trf.xlu0
      %v1677 = vpop.trf.xlu0
      %1678 = vst.msk [vmem:[%s518] sm:$0xff] %vm1072, %v1566
      %1679 = vst.msk [vmem:[%s518 + $0x8] sm:$0xff] %vm1072, %v1567
      %1680 = vst.msk [vmem:[%s518 + $0x10] sm:$0xff] %vm1072, %v1598
      %1681 = vst.msk [vmem:[%s518 + $0x18] sm:$0xff] %vm1072, %v1599
      %1682 = vst.msk [vmem:[%s518 + $0x20] sm:$0xff] %vm1072, %v1630
      %1683 = vst.msk [vmem:[%s518 + $0x28] sm:$0xff] %vm1072, %v1631
      %1684 = vst.msk [vmem:[%s518 + $0x30] sm:$0xff] %vm1072, %v1662
      %1685 = vst.msk [vmem:[%s518 + $0x38] sm:$0xff] %vm1072, %v1663
      %v1686 = vsel %vm1072, %v1566, -inf
      %1687 = vmax.xlane.f32.xlu0 %v1686
      %v1688 = vpop.xlane.xlu0 %1687
      %v1689 = vsel %vm1072, %v1567, -inf
      %1690 = vmax.xlane.f32.xlu0 %v1689
      %v1691 = vpop.xlane.xlu0 %1690
      %v1692 = vsel %vm1072, %v1598, -inf
      %1693 = vmax.xlane.f32.xlu0 %v1692
      %v1694 = vpop.xlane.xlu0 %1693
      %v1695 = vsel %vm1072, %v1599, -inf
      %1696 = vmax.xlane.f32.xlu0 %v1695
      %v1697 = vpop.xlane.xlu0 %1696
      %v1698 = vsel %vm1072, %v1630, -inf
      %1699 = vmax.xlane.f32.xlu0 %v1698
      %v1700 = vpop.xlane.xlu0 %1699
      %v1701 = vsel %vm1072, %v1631, -inf
      %1702 = vmax.xlane.f32.xlu0 %v1701
      %v1703 = vpop.xlane.xlu0 %1702
      %v1704 = vsel %vm1072, %v1662, -inf
      %1705 = vmax.xlane.f32.xlu0 %v1704
      %v1706 = vpop.xlane.xlu0 %1705
      %v1707 = vsel %vm1072, %v1663, -inf
      %1708 = vmax.xlane.f32.xlu0 %v1707
      %v1709 = vpop.xlane.xlu0 %1708
      %v1710 = vsub.f32 %v1566, %v1688
      %v1711 = vsub.f32 %v1567, %v1691
      %v1712 = vsub.f32 %v1598, %v1694
      %v1713 = vsub.f32 %v1599, %v1697
      %v1714 = vsub.f32 %v1630, %v1700
      %v1715 = vsub.f32 %v1631, %v1703
      %v1716 = vsub.f32 %v1662, %v1706
      %v1717 = vsub.f32 %v1663, %v1709
      %v1718 = vmul.f32 %v1710, 1.442695
      %v1719 = vpow.pop %v1718
      %v1720 = vmul.f32 %v1711, 1.442695
      %v1721 = vpow.pop %v1720
      %v1722 = vmul.f32 %v1712, 1.442695
      %v1723 = vpow.pop %v1722
      %v1724 = vmul.f32 %v1713, 1.442695
      %v1725 = vpow.pop %v1724
      %v1726 = vmul.f32 %v1714, 1.442695
      %v1727 = vpow.pop %v1726
      %v1728 = vmul.f32 %v1715, 1.442695
      %v1729 = vpow.pop %v1728
      %v1730 = vmul.f32 %v1716, 1.442695
      %v1731 = vpow.pop %v1730
      %v1732 = vmul.f32 %v1717, 1.442695
      %v1733 = vpow.pop %v1732
      %v1734 = vsel %vm1072, %v1719, 0.0
      %1735 = vadd.xlane.f32.xlu0 %v1734
      %v1736 = vpop.xlane.xlu0 %1735
      %v1737 = vsel %vm1072, %v1721, 0.0
      %1738 = vadd.xlane.f32.xlu0 %v1737
      %v1739 = vpop.xlane.xlu0 %1738
      %v1740 = vsel %vm1072, %v1723, 0.0
      %1741 = vadd.xlane.f32.xlu0 %v1740
      %v1742 = vpop.xlane.xlu0 %1741
      %v1743 = vsel %vm1072, %v1725, 0.0
      %1744 = vadd.xlane.f32.xlu0 %v1743
      %v1745 = vpop.xlane.xlu0 %1744
      %v1746 = vsel %vm1072, %v1727, 0.0
      %1747 = vadd.xlane.f32.xlu0 %v1746
      %v1748 = vpop.xlane.xlu0 %1747
      %v1749 = vsel %vm1072, %v1729, 0.0
      %1750 = vadd.xlane.f32.xlu0 %v1749
      %v1751 = vpop.xlane.xlu0 %1750
      %v1752 = vsel %vm1072, %v1731, 0.0
      %1753 = vadd.xlane.f32.xlu0 %v1752
      %v1754 = vpop.xlane.xlu0 %1753
      %v1755 = vsel %vm1072, %v1733, 0.0
      %1756 = vadd.xlane.f32.xlu0 %v1755
      %v1757 = vpop.xlane.xlu0 %1756
      %v1758 = vrcp.pop %v1736
      %v1759 = vrcp.pop %v1739
      %v1760 = vrcp.pop %v1742
      %v1761 = vrcp.pop %v1745
      %v1762 = vrcp.pop %v1748
      %v1763 = vrcp.pop %v1751
      %v1764 = vrcp.pop %v1754
      %v1765 = vrcp.pop %v1757
      %v1766 = vmul.f32 %v1719, %v1758
      %v1767 = vmul.f32 %v1721, %v1759
      %v1768 = vmul.f32 %v1723, %v1760
      %v1769 = vmul.f32 %v1725, %v1761
      %v1770 = vmul.f32 %v1727, %v1762
      %v1771 = vmul.f32 %v1729, %v1763
      %v1772 = vmul.f32 %v1731, %v1764
      %v1773 = vmul.f32 %v1733, %v1765
      %1774 = vrot.lane.b32.xlu0 %v1115, 124
      %v1775 = vpop.permute.xlu0 %1774
      %1776 = vrot.lane.b32.xlu0 %v1118, 124
      %v1777 = vpop.permute.xlu0 %1776
      %v1781 = vsel %vm1072, %v1766, 0
      %v1784 = vsel %vm1072, %v1767, 0
      %1786 = vmatpush.msra.mxu0 0.0
      %1787 = vmatpush.msra.mxu0 0.0
      %1788 = vmatpush.msra.mxu0 0.0
      %1789 = vmatpush.msra.mxu0 0.0
      %1790 = vmatpush.msra.mxu0 0.0
      %1791 = vmatpush.msra.mxu0 0.0
      %1792 = vmatpush.msra.mxu0 0.0
      %1793 = vmatpush.msra.mxu0 0.0
      %1794 = vmatpush.msra.mxu0 0.0
      %1795 = vmatpush.msra.mxu0 0.0
      %1796 = vmatpush.msra.mxu0 0.0
      %1797 = vmatpush.msra.mxu0 0.0
      %1798 = vmatpush.msra.mxu0 0.0
      %1799 = vmatpush.msra.mxu0 0.0
      %1800 = vmatpush.msra.mxu0 %v1777
      %1801 = vmatpush.msra.mxu0 %v1775
      %1802 = vmatmul.f32.gmra.mxu0 %v1781
      %v1803 = vpop.f32.mrf.mxu0
      %v1804 = vadd.f32 0.0, %v1803
      %1805 = vmatmul.f32.gmra.mxu0 %v1784
      %v1806 = vpop.f32.mrf.mxu0
      %v1807 = vadd.f32 0.0, %v1806
      %1808 = vdwg.mxu0
      %1809 = vrot.lane.b32.xlu0 %v1121, 124
      %v1810 = vpop.permute.xlu0 %1809
      %1811 = vrot.lane.b32.xlu0 %v1124, 124
      %v1812 = vpop.permute.xlu0 %1811
      %v1816 = vsel %vm1072, %v1768, 0
      %v1819 = vsel %vm1072, %v1769, 0
      %1821 = vmatpush.msra.mxu0 0.0
      %1822 = vmatpush.msra.mxu0 0.0
      %1823 = vmatpush.msra.mxu0 0.0
      %1824 = vmatpush.msra.mxu0 0.0
      %1825 = vmatpush.msra.mxu0 0.0
      %1826 = vmatpush.msra.mxu0 0.0
      %1827 = vmatpush.msra.mxu0 0.0
      %1828 = vmatpush.msra.mxu0 0.0
      %1829 = vmatpush.msra.mxu0 0.0
      %1830 = vmatpush.msra.mxu0 0.0
      %1831 = vmatpush.msra.mxu0 0.0
      %1832 = vmatpush.msra.mxu0 0.0
      %1833 = vmatpush.msra.mxu0 0.0
      %1834 = vmatpush.msra.mxu0 0.0
      %1835 = vmatpush.msra.mxu0 %v1812
      %1836 = vmatpush.msra.mxu0 %v1810
      %1837 = vmatmul.f32.gmra.mxu0 %v1816
      %v1838 = vpop.f32.mrf.mxu0
      %v1839 = vadd.f32 0.0, %v1838
      %1840 = vmatmul.f32.gmra.mxu0 %v1819
      %v1841 = vpop.f32.mrf.mxu0
      %v1842 = vadd.f32 0.0, %v1841
      %1843 = vdwg.mxu0
      %1844 = vrot.lane.b32.xlu0 %v1127, 124
      %v1845 = vpop.permute.xlu0 %1844
      %1846 = vrot.lane.b32.xlu0 %v1130, 124
      %v1847 = vpop.permute.xlu0 %1846
      %v1851 = vsel %vm1072, %v1770, 0
      %v1854 = vsel %vm1072, %v1771, 0
      %1856 = vmatpush.msra.mxu0 0.0
      %1857 = vmatpush.msra.mxu0 0.0
      %1858 = vmatpush.msra.mxu0 0.0
      %1859 = vmatpush.msra.mxu0 0.0
      %1860 = vmatpush.msra.mxu0 0.0
      %1861 = vmatpush.msra.mxu0 0.0
      %1862 = vmatpush.msra.mxu0 0.0
      %1863 = vmatpush.msra.mxu0 0.0
      %1864 = vmatpush.msra.mxu0 0.0
      %1865 = vmatpush.msra.mxu0 0.0
      %1866 = vmatpush.msra.mxu0 0.0
      %1867 = vmatpush.msra.mxu0 0.0
      %1868 = vmatpush.msra.mxu0 0.0
      %1869 = vmatpush.msra.mxu0 0.0
      %1870 = vmatpush.msra.mxu0 %v1847
      %1871 = vmatpush.msra.mxu0 %v1845
      %1872 = vmatmul.f32.gmra.mxu0 %v1851
      %v1873 = vpop.f32.mrf.mxu0
      %v1874 = vadd.f32 0.0, %v1873
      %1875 = vmatmul.f32.gmra.mxu0 %v1854
      %v1876 = vpop.f32.mrf.mxu0
      %v1877 = vadd.f32 0.0, %v1876
      %1878 = vdwg.mxu0
      %1879 = vrot.lane.b32.xlu0 %v1133, 124
      %v1880 = vpop.permute.xlu0 %1879
      %1881 = vrot.lane.b32.xlu0 %v1136, 124
      %v1882 = vpop.permute.xlu0 %1881
      %v1886 = vsel %vm1072, %v1772, 0
      %v1889 = vsel %vm1072, %v1773, 0
      %1891 = vmatpush.msra.mxu0 0.0
      %1892 = vmatpush.msra.mxu0 0.0
      %1893 = vmatpush.msra.mxu0 0.0
      %1894 = vmatpush.msra.mxu0 0.0
      %1895 = vmatpush.msra.mxu0 0.0
      %1896 = vmatpush.msra.mxu0 0.0
      %1897 = vmatpush.msra.mxu0 0.0
      %1898 = vmatpush.msra.mxu0 0.0
      %1899 = vmatpush.msra.mxu0 0.0
      %1900 = vmatpush.msra.mxu0 0.0
      %1901 = vmatpush.msra.mxu0 0.0
      %1902 = vmatpush.msra.mxu0 0.0
      %1903 = vmatpush.msra.mxu0 0.0
      %1904 = vmatpush.msra.mxu0 0.0
      %1905 = vmatpush.msra.mxu0 %v1882
      %1906 = vmatpush.msra.mxu0 %v1880
      %1907 = vmatmul.f32.gmra.mxu0 %v1886
      %v1908 = vpop.f32.mrf.mxu0
      %v1909 = vadd.f32 0.0, %v1908
      %1910 = vmatmul.f32.gmra.mxu0 %v1889
      %v1911 = vpop.f32.mrf.mxu0
      %v1912 = vadd.f32 0.0, %v1911
      %1913 = vdwg.mxu0
      %v1914 = vld [vmem:[%s9] sm:$0x1]
      %v1916 = vperm.slane %v1914, 0
      %v1918 = vmul.f32 %v1804, %v1916
      %v1919 = vmul.f32 %v1807, %v1916
      %v1920 = vmul.f32 %v1839, %v1916
      %v1921 = vmul.f32 %v1842, %v1916
      %v1922 = vmul.f32 %v1874, %v1916
      %v1923 = vmul.f32 %v1877, %v1916
      %v1924 = vmul.f32 %v1909, %v1916
      %v1925 = vmul.f32 %v1912, %v1916
      %v1926 = vadd.f32 %v528, %v1918
      %v1927 = vadd.f32 %v529, %v1919
      %v1928 = vadd.f32 %v530, %v1920
      %v1929 = vadd.f32 %v531, %v1921
      %v1930 = vadd.f32 %v532, %v1922
      %v1931 = vadd.f32 %v533, %v1923
      %v1932 = vadd.f32 %v534, %v1924
      %v1933 = vadd.f32 %v535, %v1925
      %1934 = vst.msk [vmem:[%s504] sm:$0xff] %vm538, %v1926
      %1935 = vst.msk [vmem:[%s504 + $0x8] sm:$0xff] %vm538, %v1927
      %1936 = vst.msk [vmem:[%s504 + $0x10] sm:$0xff] %vm538, %v1928
      %1937 = vst.msk [vmem:[%s504 + $0x18] sm:$0xff] %vm538, %v1929
      %1938 = vst.msk [vmem:[%s504 + $0x20] sm:$0xff] %vm538, %v1930
      %1939 = vst.msk [vmem:[%s504 + $0x28] sm:$0xff] %vm538, %v1931
      %1940 = vst.msk [vmem:[%s504 + $0x30] sm:$0xff] %vm538, %v1932
      %1941 = vst.msk [vmem:[%s504 + $0x38] sm:$0xff] %vm538, %v1933
      %s1942 = smul.u32 4, %s25
      %p1943 = scmp.lt.s32.totalorder %s1942, 31
      %s1944 = scalar_select %p1943, %s1942, 31
      %s1945 = smul.addr %s1944, 2
      %s1946 = smul.addr %s1945, 8
      %s1947 = scalar_lea.vmem %s10, %s1946
      %s1948 = smul.u32 4, %s25
      %p1949 = scmp.lt.s32.totalorder %s1948, 31
      %s1950 = scalar_select %p1949, %s1948, 31
      %s1951 = smul.addr %s1950, 2
      %s1952 = smul.addr %s1951, 8
      %s1953 = scalar_lea.vmem %s11, %s1952
      %s1954 = smul.u32 4, %s25
      %p1955 = scmp.lt.s32.totalorder %s1954, 31
      %s1956 = scalar_select %p1955, %s1954, 31
      %s1957 = smul.addr %s1956, 2
      %s1958 = smul.addr %s1957, 8
      %s1959 = scalar_lea.vmem %s12, %s1958
      %s1960 = smul.u32 4, %s25
      %p1961 = scmp.lt.s32.totalorder %s1960, 31
      %s1962 = scalar_select %p1961, %s1960, 31
      %s1963 = smul.addr %s1962, 2
      %s1964 = smul.addr %s1963, 8
      %s1965 = scalar_lea.vmem %s13, %s1964
      // Predicated region
      $region61: #{tpu_custom_call.1} parent=59 // pred_check
        %p1966 = pneg %p263
      $region62: #{tpu_custom_call.1} parent=59 // pred_check_branch
        %1968 = sbr.rel (%p1966) target = $region64
      $region63: #{tpu_custom_call.1} parent=59 // pred_region
        %s1969 = smul.u32 4, %s25
      $region64: #{tpu_custom_call.1} parent=59 // pred_fallthru
        _
      // Predicated region
      $region65: #{tpu_custom_call.1} parent=59 // pred_check
        %p1970 = pneg %p289
      $region66: #{tpu_custom_call.1} parent=59 // pred_check_branch
        %1972 = sbr.rel (%p1970) target = $region68
      $region67: #{tpu_custom_call.1} parent=59 // pred_region
        %s1973 = smul.u32 4, %s25
      $region68: #{tpu_custom_call.1} parent=59 // pred_fallthru
        _
      // Predicated region
      $region69: #{tpu_custom_call.1} parent=59 // pred_check
        %p1974 = pneg %p315
      $region70: #{tpu_custom_call.1} parent=59 // pred_check_branch
        %1976 = sbr.rel (%p1974) target = $region72
      $region71: #{tpu_custom_call.1} parent=59 // pred_region
        %s1977 = smul.u32 4, %s25
      $region72: #{tpu_custom_call.1} parent=59 // pred_fallthru
        _
      // Predicated region
      $region73: #{tpu_custom_call.1} parent=59 // pred_check
        %p1978 = pneg %p341
      $region74: #{tpu_custom_call.1} parent=59 // pred_check_branch
        %1980 = sbr.rel (%p1978) target = $region76
      $region75: #{tpu_custom_call.1} parent=59 // pred_region
        %s1981 = smul.u32 4, %s25
      $region76: #{tpu_custom_call.1} parent=59 // pred_fallthru
        _
    $region60: #{tpu_custom_call.1} parent=5 // pred_fallthru
      _
    %p1982 = scmp.le.s32.totalorder 2, %s20
    // Predicated region
    $region77: #{tpu_custom_call.1} parent=5 // pred_check
      %p1983 = pneg %p1982
    $region78: #{tpu_custom_call.1} parent=5 // pred_check_branch
      %1985 = sbr.rel (%p1983) target = $region80
    $region79: #{tpu_custom_call.1} parent=5 // pred_region
      %s1986 = ssub.s32 %s20, 2
      // Predicated region
      $region81: #{tpu_custom_call.1} parent=79 // pred_check
        %p1987 = pneg %p269
      $region82: #{tpu_custom_call.1} parent=79 // pred_check_branch
        %1989 = sbr.rel (%p1987) target = $region84
      $region83: #{tpu_custom_call.1} parent=79 // pred_region
        %s1990 = smul.u32 4, %s26
        %p1991 = scmp.lt.s32.totalorder %s1990, 31
        %s1992 = scalar_select %p1991, %s1990, 31
        %s1993 = smul.addr %s1992, 2
        %s1994 = smul.addr %s1993, 8
        %s1995 = scalar_lea.vmem %s10, %s1994
      $region84: #{tpu_custom_call.1} parent=79 // pred_fallthru
        _
      // Predicated region
      $region85: #{tpu_custom_call.1} parent=79 // pred_check
        %p1996 = pneg %p295
      $region86: #{tpu_custom_call.1} parent=79 // pred_check_branch
        %1998 = sbr.rel (%p1996) target = $region88
      $region87: #{tpu_custom_call.1} parent=79 // pred_region
        %s1999 = smul.u32 4, %s26
        %p2000 = scmp.lt.s32.totalorder %s1999, 31
        %s2001 = scalar_select %p2000, %s1999, 31
        %s2002 = smul.addr %s2001, 2
        %s2003 = smul.addr %s2002, 8
        %s2004 = scalar_lea.vmem %s11, %s2003
      $region88: #{tpu_custom_call.1} parent=79 // pred_fallthru
        _
      // Predicated region
      $region89: #{tpu_custom_call.1} parent=79 // pred_check
        %p2005 = pneg %p321
      $region90: #{tpu_custom_call.1} parent=79 // pred_check_branch
        %2007 = sbr.rel (%p2005) target = $region92
      $region91: #{tpu_custom_call.1} parent=79 // pred_region
        %s2008 = smul.u32 4, %s26
        %p2009 = scmp.lt.s32.totalorder %s2008, 31
        %s2010 = scalar_select %p2009, %s2008, 31
        %s2011 = smul.addr %s2010, 2
        %s2012 = smul.addr %s2011, 8
        %s2013 = scalar_lea.vmem %s12, %s2012
      $region92: #{tpu_custom_call.1} parent=79 // pred_fallthru
        _
      // Predicated region
      $region93: #{tpu_custom_call.1} parent=79 // pred_check
        %p2014 = pneg %p347
      $region94: #{tpu_custom_call.1} parent=79 // pred_check_branch
        %2016 = sbr.rel (%p2014) target = $region96
      $region95: #{tpu_custom_call.1} parent=79 // pred_region
        %s2017 = smul.u32 4, %s26
        %p2018 = scmp.lt.s32.totalorder %s2017, 31
        %s2019 = scalar_select %p2018, %s2017, 31
        %s2020 = smul.addr %s2019, 2
        %s2021 = smul.addr %s2020, 8
        %s2022 = scalar_lea.vmem %s13, %s2021
      $region96: #{tpu_custom_call.1} parent=79 // pred_fallthru
        _
    $region80: #{tpu_custom_call.1} parent=5 // pred_fallthru
      _
  $region6: #{tpu_custom_call.1} parent=0 // loop_footer
    %s24 = sadd.s32 1, %s20
  $region7: #{tpu_custom_call.1} parent=0 // loop_footer_branch
    %19 = sbr.rel target = $region3
  $region8: #{tpu_custom_call.1} parent=0 // loop_exit
    _

</llo_original>
